<compile_context>
chip_gen: v7x
topology: tpu7x:2x2x1
jax: 0.10.0
libtpu: 0.0.40
codegen_flags: <defaults>
</compile_context>

<pallas_src>
import functools

import jax
import jax.numpy as jnp
from jax import lax
from jax.experimental import pallas as pl
from jax.experimental.pallas import tpu as pltpu


# ----------------------------------------------------------------------------
# Fused Pallas kernel (both layers, both directions, folded fc+fc2 head)
# ----------------------------------------------------------------------------
def _bidir_layer(xga, xgb, wh, h, c, y_scr, *, T, H):
    """One bidirectional LSTM layer, both directions fused per step.

    xga: (T, BP, 8H)  hoisted projection, read at loop index t.
    xgb: (T, BP, 8H)  hoisted projection, read at loop index T-1-t.
         (column packing of the weights guarantees xga[t] + xgb[T-1-t] carries
          input time t in the forward gate columns and time T-1-t in the
          backward gate columns -- no per-step masking or shuffles needed.)
    wh : (2H, 8H) bf16 recurrent weight acting on fused h = [h_fwd | h_bwd].
    h,c: (BP, 2H) fused states; column layout [fwd | bwd].
    y_scr: optional VMEM scratch (T, BP, 2H); y_scr[t] receives the fused h.
    Returns (h_final, c_final, h_after_step0).
    """
    h_first = None
    for t in range(T):
        # --- the only op on the serial chain that touches the MXU ---
        hh = jnp.dot(h.astype(jnp.bfloat16), wh,
                     preferred_element_type=jnp.float32)          # (BP, 8H)
        gates = xga[t] + xgb[T - 1 - t] + hh                       # off-chain adds
        # --- fused cell math: one sigmoid(6H), one tanh(2H), one tanh(c) ---
        sig = jax.nn.sigmoid(gates[:, 0:6 * H])                    # [i | f | o], both dirs
        g = jnp.tanh(gates[:, 6 * H:8 * H])                        # [g_f | g_b]
        c = sig[:, 2 * H:4 * H] * c + sig[:, 0:2 * H] * g          # (BP, 2H)
        h = sig[:, 4 * H:6 * H] * jnp.tanh(c)                      # (BP, 2H)
        if y_scr is not None:
            y_scr[t] = h                                           # aligned (8, 2H) store
        if t == 0:
            h_first = h
    return h, c, h_first


def _fused_lstm_model_kernel(x_ref, h0_ref, c0_ref,
                             wx0a_ref, wx0b_ref, wh0_ref,
                             wx1a_ref, wx1b_ref, wh1_ref, whead_ref,
                             out_ref, state_ref, y0_scr, *, T, BP, H):
    f32 = jnp.float32
    G = 8 * H

    # ---- layer 0: hoisted input->gate projection (all timesteps, both dirs) ----
    x2d = x_ref[...]                                               # (T*BP, Din)
    xg0a = jnp.dot(x2d, wx0a_ref[...], preferred_element_type=f32).reshape(T, BP, G)
    xg0b = jnp.dot(x2d, wx0b_ref[...], preferred_element_type=f32).reshape(T, BP, G)
    h0 = jnp.concatenate([h0_ref[0], h0_ref[1]], axis=1)           # (BP, 2H)
    c0 = jnp.concatenate([c0_ref[0], c0_ref[1]], axis=1)
    hL0, cL0, _ = _bidir_layer(xg0a, xg0b, wh0_ref[...], h0, c0, y0_scr, T=T, H=H)

    # ---- layer 1: input projection straight from the VMEM scratch ----
    y0 = y0_scr[...].reshape(T * BP, 2 * H)                        # [hf0(t) | hb0(T-1-t)]
    xg1a = jnp.dot(y0, wx1a_ref[...], preferred_element_type=f32).reshape(T, BP, G)
    xg1b = jnp.dot(y0, wx1b_ref[...], preferred_element_type=f32).reshape(T, BP, G)
    h1 = jnp.concatenate([h0_ref[2], h0_ref[3]], axis=1)
    c1 = jnp.concatenate([c0_ref[2], c0_ref[3]], axis=1)
    hL1, cL1, h1_first = _bidir_layer(xg1a, xg1b, wh1_ref[...], h1, c1, None, T=T, H=H)

    # ---- head: fc then fc2, pre-folded into one (2H, H) matmul ----
    # rnn output at the last timestep is [hf1(T-1) | hb1(T-1)];
    # hb1(T-1) is the backward direction's step-0 output.
    h_last_time = jnp.concatenate([hL1[:, 0:H], h1_first[:, H:2 * H]], axis=1)
    out_ref[...] = jnp.dot(h_last_time, whead_ref[...], preferred_element_type=f32)

    # ---- final (h_n, c_n): one lane-dense (BP, 8H) slab (unmasked stores) ----
    # per-row layout: [hf_l0 hb_l0 hf_l1 hb_l1 | cf_l0 cb_l0 cf_l1 cb_l1]
    state_ref[...] = jnp.concatenate([hL0, hL1, cL0, cL1], axis=1)


# ----------------------------------------------------------------------------
# Wrapper around the single fused pallas_call
# ----------------------------------------------------------------------------
@jax.jit
def lstm_model_forward_pallas(prepped, x, hidden):
    """x: (B, T, in_size); hidden = (h0, c0), each (n_layers*2, B, H)."""
    h0, c0 = hidden
    B, T, Din = x.shape
    H = h0.shape[-1]

    # Pad batch to a sublane multiple so every per-step slice/store is aligned.
    BP = max(8, ((B + 7) // 8) * 8)
    pad_b = BP - B
    x_tm = jnp.pad(jnp.transpose(x, (1, 0, 2)), ((0, 0), (0, pad_b), (0, 0)))
    x2d = x_tm.reshape(T * BP, Din)                                # time-major rows
    h0p = jnp.pad(h0, ((0, 0), (0, pad_b), (0, 0)))
    c0p = jnp.pad(c0, ((0, 0), (0, pad_b), (0, 0)))

    kernel = functools.partial(_fused_lstm_model_kernel, T=T, BP=BP, H=H)
    vmem = pl.BlockSpec(memory_space=pltpu.MemorySpace.VMEM)
    out_p, state = pl.pallas_call(
        kernel,
        out_shape=(
            jax.ShapeDtypeStruct((BP, H), jnp.float32),            # logits (masked vst, tiny)
            jax.ShapeDtypeStruct((BP, 8 * H), jnp.float32),        # h_n/c_n slab (lane-dense)
        ),
        in_specs=[vmem] * 10,
        out_specs=(vmem, vmem),
        scratch_shapes=[pltpu.VMEM((T, BP, 2 * H), jnp.float32)],  # layer-1 input
    )(x2d, h0p, c0p,
      prepped["wx0a"], prepped["wx0b"], prepped["wh0"],
      prepped["wx1a"], prepped["wx1b"], prepped["wh1"],
      prepped["w_head"])

    out = out_p[:B]
    hc = state[:B]
    h_n = jnp.transpose(hc[:, 0:4 * H].reshape(B, 4, H), (1, 0, 2))
    c_n = jnp.transpose(hc[:, 4 * H:8 * H].reshape(B, 4, H), (1, 0, 2))
    return out, (h_n, c_n)


# ----------------------------------------------------------------------------
# One-time weight preparation (gate permutation / packing / bf16 cast / head fold)
# ----------------------------------------------------------------------------
def _place_dir_cols(w_pt, direction, H):
    """PyTorch (4H, in_dim) weight (gate-row order i, f, g, o) -> (in_dim, 8H)
    matrix whose columns follow the fused layout [i_f i_b | f_f f_b | o_f o_b |
    g_f g_b]; only `direction`'s columns (0=fwd, 1=bwd) are non-zero."""
    in_dim = w_pt.shape[1]
    pt_block = {"i": 0, "f": 1, "o": 3, "g": 2}                    # PyTorch row blocks
    zero = jnp.zeros((in_dim, H), dtype=w_pt.dtype)
    cols = []
    for gate in ("i", "f", "o", "g"):                              # kernel gate order
        b = pt_block[gate]
        wcol = w_pt[b * H:(b + 1) * H, :].T                        # (in_dim, H)
        cols += ([wcol, zero] if direction == 0 else [zero, wcol])
    return jnp.concatenate(cols, axis=1)                           # (in_dim, 8H)


def prepare_params(params, *, hidden, n_layers=2):
    assert n_layers == 2, "fused kernel is specialized for n_layers=2"
    H = hidden
    bf16 = jnp.bfloat16
    p = {}

    # ---- layer 0: raw input, Din wide ----
    p["wx0a"] = _place_dir_cols(params["w_ih_l0"], 0, H)                    # fwd cols
    p["wx0b"] = _place_dir_cols(params["w_ih_l0_reverse"], 1, H)            # bwd cols
    p["wh0"] = jnp.concatenate(
        [_place_dir_cols(params["w_hh_l0"], 0, H),
         _place_dir_cols(params["w_hh_l0_reverse"], 1, H)], axis=0).astype(bf16)

    # ---- layer 1: input is [hf0 | hb0] (2H wide), delivered by the kernel as
    # scratch rows [hf0(t) | hb0(T-1-t)].  Pack two matrices so that
    #   xg1a (read at t)      = hf0(t)     -> fwd cols,  hb0(T-1-t) -> bwd cols
    #   xg1b (read at T-1-t)  = hf0(T-1-t) -> bwd cols,  hb0(t)     -> fwd cols
    # and their sum reproduces the exact PyTorch layer-1 gate pre-activations.
    w1f, w1b = params["w_ih_l1"], params["w_ih_l1_reverse"]                 # (4H, 2H)
    wf_hf = _place_dir_cols(w1f[:, 0:H], 0, H)
    wf_hb = _place_dir_cols(w1f[:, H:2 * H], 0, H)
    wb_hf = _place_dir_cols(w1b[:, 0:H], 1, H)
    wb_hb = _place_dir_cols(w1b[:, H:2 * H], 1, H)
    p["wx1a"] = jnp.concatenate([wf_hf, wb_hb], axis=0)                     # (2H, 8H)
    p["wx1b"] = jnp.concatenate([wb_hf, wf_hb], axis=0)                     # (2H, 8H)
    p["wh1"] = jnp.concatenate(
        [_place_dir_cols(params["w_hh_l1"], 0, H),
         _place_dir_cols(params["w_hh_l1_reverse"], 1, H)], axis=0).astype(bf16)

    # ---- head: out = [hf1(T-1)|hb1(T-1)] @ blockdiag(fc.T, fc.T) @ fc2.T ----
    fcT = params["fc"].T                                                    # (H, H)
    fc2T = params["fc2"].T                                                  # (2H, H)
    p["w_head"] = jnp.concatenate([fcT @ fc2T[0:H], fcT @ fc2T[H:2 * H]], axis=0)
    return p


# ----------------------------------------------------------------------------
# Pure-JAX reference (PyTorch-layout params, independent of the kernel path)
# ----------------------------------------------------------------------------
def _lstm_layer_dir_ref(x_tm, w_ih, w_hh, h0, c0):
    H = h0.shape[-1]

    def step(carry, x_t):
        h, c = carry
        gates = x_t @ w_ih.T + h @ w_hh.T
        i = jax.nn.sigmoid(gates[:, 0 * H:1 * H])
        f = jax.nn.sigmoid(gates[:, 1 * H:2 * H])
        g = jnp.tanh(gates[:, 2 * H:3 * H])
        o = jax.nn.sigmoid(gates[:, 3 * H:4 * H])
        c = f * c + i * g
        h = o * jnp.tanh(c)
        return (h, c), h

    (hT, cT), outs = lax.scan(step, (h0, c0), x_tm)
    return outs, hT, cT


def lstm_model_forward_ref(params, x, hidden, *, n_layers=2):
    h0, c0 = hidden
    B, T, _ = x.shape
    H = params["fc"].shape[0]

    layer_in = jnp.transpose(x, (1, 0, 2))            # (T, B, Din)
    h_finals, c_finals = [], []
    for l in range(n_layers):
        out_f, hT_f, cT_f = _lstm_layer_dir_ref(
            layer_in, params[f"w_ih_l{l}"], params[f"w_hh_l{l}"], h0[2 * l], c0[2 * l])
        x_rev = jnp.flip(layer_in, axis=0)
        out_b_rev, hT_b, cT_b = _lstm_layer_dir_ref(
            x_rev, params[f"w_ih_l{l}_reverse"], params[f"w_hh_l{l}_reverse"],
            h0[2 * l + 1], c0[2 * l + 1])
        out_b = jnp.flip(out_b_rev, axis=0)
        layer_in = jnp.concatenate([out_f, out_b], axis=-1)
        h_finals += [hT_f, hT_b]
        c_finals += [cT_f, cT_b]

    rnn_out = jnp.transpose(layer_in, (1, 0, 2))      # (B, T, 2H)
    h_n = jnp.stack(h_finals, axis=0)
    c_n = jnp.stack(c_finals, axis=0)

    last = rnn_out[:, -1, :]                          # (B, 2H)
    last_rows = last.reshape(B * 2, H)
    y = last_rows @ params["fc"].T
    y = y.reshape(B, 2 * H)
    out = y @ params["fc2"].T
    return out, (h_n, c_n)


# ----------------------------------------------------------------------------
# Deterministic parameter construction (shapes follow nn.LSTM / nn.Linear)
# ----------------------------------------------------------------------------
def make_params(key, *, seq_length, hidden, n_layers=2):
    H = hidden
    params = {}
    k = key

    def nxt():
        nonlocal k
        k, sub = jax.random.split(k)
        return sub

    for l in range(n_layers):
        din = seq_length if l == 0 else 2 * H
        for suffix in ("", "_reverse"):
            params[f"w_ih_l{l}{suffix}"] = 0.1 * jax.random.normal(
                nxt(), (4 * H, din), dtype=jnp.float32)
            params[f"w_hh_l{l}{suffix}"] = 0.1 * jax.random.normal(
                nxt(), (4 * H, H), dtype=jnp.float32)
    params["fc"] = 0.1 * jax.random.normal(nxt(), (H, H), dtype=jnp.float32)
    params["fc2"] = 0.1 * jax.random.normal(nxt(), (H, 2 * H), dtype=jnp.float32)
    return params


# ----------------------------------------------------------------------------
# Main
# ----------------------------------------------------------------------------
if __name__ == "__main__":
    # Small shapes consistent with the module: in_size == seq_length.
    BATCH, SEQ, HIDDEN, N_LAYERS = 2, 8, 32, 2

    key = jax.random.PRNGKey(0)
    kp, kx = jax.random.split(key)
    params = make_params(kp, seq_length=SEQ, hidden=HIDDEN, n_layers=N_LAYERS)
    prepped = prepare_params(params, hidden=HIDDEN, n_layers=N_LAYERS)

    x = jax.random.normal(kx, (BATCH, SEQ, SEQ), dtype=jnp.float32)
    # init_hidden: zeros of shape (n_layers*2, B, H)
    h0 = jnp.zeros((N_LAYERS * 2, BATCH, HIDDEN), dtype=jnp.float32)
    c0 = jnp.zeros((N_LAYERS * 2, BATCH, HIDDEN), dtype=jnp.float32)

    out, (h_n, c_n) = lstm_model_forward_pallas(prepped, x, (h0, c0))
    jax.block_until_ready((out, h_n, c_n))

    # Pure-JAX f32 reference (PyTorch-layout params).  The kernel's recurrent
    # matmul runs in bf16 (c-state / accumulation stay f32), so the tolerance
    # is loosened accordingly (review suggested ~1e-2; use 2e-2 for margin).
    out_ref, (h_ref, c_ref) = lstm_model_forward_ref(params, x, (h0, c0),
                                                     n_layers=N_LAYERS)
    assert out.shape == (BATCH, HIDDEN)
    assert h_n.shape == (N_LAYERS * 2, BATCH, HIDDEN)
    assert c_n.shape == (N_LAYERS * 2, BATCH, HIDDEN)
    assert jnp.allclose(out, out_ref, atol=2e-2, rtol=2e-2)
    assert jnp.allclose(h_n, h_ref, atol=2e-2, rtol=2e-2)
    assert jnp.allclose(c_n, c_ref, atol=2e-2, rtol=2e-2)

    print("KERNEL_OK")
</pallas_src>

<mosaic_0001>
module attributes {stable_mosaic.version = 11 : i64} {
  func.func @_fused_lstm_model_kernel(%arg0: memref<64x8xf32, #tpu.memory_space<vmem>>, %arg1: memref<4x8x32xf32, #tpu.memory_space<vmem>>, %arg2: memref<4x8x32xf32, #tpu.memory_space<vmem>>, %arg3: memref<8x256xf32, #tpu.memory_space<vmem>>, %arg4: memref<8x256xf32, #tpu.memory_space<vmem>>, %arg5: memref<64x256xbf16, #tpu.memory_space<vmem>>, %arg6: memref<64x256xf32, #tpu.memory_space<vmem>>, %arg7: memref<64x256xf32, #tpu.memory_space<vmem>>, %arg8: memref<64x256xbf16, #tpu.memory_space<vmem>>, %arg9: memref<64x32xf32, #tpu.memory_space<vmem>>, %arg10: memref<8x32xf32, #tpu.memory_space<vmem>>, %arg11: memref<8x256xf32, #tpu.memory_space<vmem>>, %arg12: memref<8x8x64xf32, #tpu.memory_space<vmem>>) attributes {dimension_semantics = [], scalar_prefetch = 0 : i64, scratch_operands = 1 : i64, tpu.core_type = #tpu.core_type<tc>} {
    %c0 = arith.constant 0 : index
    %c0_0 = arith.constant 0 : index
    %0 = vector.load %arg0[%c0, %c0_0] : memref<64x8xf32, #tpu.memory_space<vmem>>, vector<64x8xf32>
    %c0_1 = arith.constant 0 : index
    %c0_2 = arith.constant 0 : index
    %1 = vector.load %arg3[%c0_1, %c0_2] : memref<8x256xf32, #tpu.memory_space<vmem>>, vector<8x256xf32>
    %cst = arith.constant dense<0.000000e+00> : vector<64x256xf32>
    %2 = tpu.matmul %0, %1, %cst {dimension_numbers = #tpu.dot_dimension_numbers<[1], [0], [0], [1], [0, 0, 1, 1], [], []>} : vector<64x8xf32>, vector<8x256xf32>, vector<64x256xf32> -> vector<64x256xf32>
    %3 = vector.shape_cast %2 : vector<64x256xf32> to vector<8x8x256xf32>
    %c0_3 = arith.constant 0 : index
    %c0_4 = arith.constant 0 : index
    %4 = vector.load %arg4[%c0_3, %c0_4] : memref<8x256xf32, #tpu.memory_space<vmem>>, vector<8x256xf32>
    %cst_5 = arith.constant dense<0.000000e+00> : vector<64x256xf32>
    %5 = tpu.matmul %0, %4, %cst_5 {dimension_numbers = #tpu.dot_dimension_numbers<[1], [0], [0], [1], [0, 0, 1, 1], [], []>} : vector<64x8xf32>, vector<8x256xf32>, vector<64x256xf32> -> vector<64x256xf32>
    %6 = vector.shape_cast %5 : vector<64x256xf32> to vector<8x8x256xf32>
    %c0_6 = arith.constant 0 : index
    %c0_7 = arith.constant 0 : index
    %c0_8 = arith.constant 0 : index
    %7 = vector.load %arg1[%c0_6, %c0_7, %c0_8] : memref<4x8x32xf32, #tpu.memory_space<vmem>>, vector<1x8x32xf32>
    %8 = vector.shape_cast %7 : vector<1x8x32xf32> to vector<8x32xf32>
    %c1 = arith.constant 1 : index
    %c0_9 = arith.constant 0 : index
    %c0_10 = arith.constant 0 : index
    %9 = vector.load %arg1[%c1, %c0_9, %c0_10] : memref<4x8x32xf32, #tpu.memory_space<vmem>>, vector<1x8x32xf32>
    %10 = vector.shape_cast %9 : vector<1x8x32xf32> to vector<8x32xf32>
    %11 = tpu.concatenate %8, %10 in 1 : vector<8x32xf32>, vector<8x32xf32> -> vector<8x64xf32>
    %c0_11 = arith.constant 0 : index
    %c0_12 = arith.constant 0 : index
    %c0_13 = arith.constant 0 : index
    %12 = vector.load %arg2[%c0_11, %c0_12, %c0_13] : memref<4x8x32xf32, #tpu.memory_space<vmem>>, vector<1x8x32xf32>
    %13 = vector.shape_cast %12 : vector<1x8x32xf32> to vector<8x32xf32>
    %c1_14 = arith.constant 1 : index
    %c0_15 = arith.constant 0 : index
    %c0_16 = arith.constant 0 : index
    %14 = vector.load %arg2[%c1_14, %c0_15, %c0_16] : memref<4x8x32xf32, #tpu.memory_space<vmem>>, vector<1x8x32xf32>
    %15 = vector.shape_cast %14 : vector<1x8x32xf32> to vector<8x32xf32>
    %16 = tpu.concatenate %13, %15 in 1 : vector<8x32xf32>, vector<8x32xf32> -> vector<8x64xf32>
    %c0_17 = arith.constant 0 : index
    %c0_18 = arith.constant 0 : index
    %17 = vector.load %arg5[%c0_17, %c0_18] : memref<64x256xbf16, #tpu.memory_space<vmem>>, vector<64x256xbf16>
    %18 = arith.truncf %11 : vector<8x64xf32> to vector<8x64xbf16>
    %cst_19 = arith.constant dense<0.000000e+00> : vector<8x256xf32>
    %19 = tpu.matmul %18, %17, %cst_19 {dimension_numbers = #tpu.dot_dimension_numbers<[1], [0], [0], [1], [0, 0, 1, 1], [], []>} : vector<8x64xbf16>, vector<64x256xbf16>, vector<8x256xf32> -> vector<8x256xf32>
    %20 = vector.extract_strided_slice %3 {offsets = [0, 0, 0], sizes = [1, 8, 256], strides = [1, 1, 1]} : vector<8x8x256xf32> to vector<1x8x256xf32>
    %21 = vector.shape_cast %20 : vector<1x8x256xf32> to vector<8x256xf32>
    %22 = vector.extract_strided_slice %6 {offsets = [7, 0, 0], sizes = [1, 8, 256], strides = [1, 1, 1]} : vector<8x8x256xf32> to vector<1x8x256xf32>
    %23 = vector.shape_cast %22 : vector<1x8x256xf32> to vector<8x256xf32>
    %24 = arith.addf %21, %23 : vector<8x256xf32>
    %25 = arith.addf %24, %19 : vector<8x256xf32>
    %26 = vector.extract_strided_slice %25 {offsets = [0, 0], sizes = [8, 192], strides = [1, 1]} : vector<8x256xf32> to vector<8x192xf32>
    %27 = arith.negf %26 : vector<8x192xf32>
    %28 = math.exp %27 : vector<8x192xf32>
    %cst_20 = arith.constant 1.000000e+00 : f32
    %29 = vector.broadcast %cst_20 : f32 to vector<8x192xf32>
    %30 = arith.addf %29, %28 : vector<8x192xf32>
    %31 = arith.divf %29, %30 : vector<8x192xf32>
    %32 = vector.extract_strided_slice %25 {offsets = [0, 192], sizes = [8, 64], strides = [1, 1]} : vector<8x256xf32> to vector<8x64xf32>
    %33 = math.tanh %32 : vector<8x64xf32>
    %34 = vector.extract_strided_slice %31 {offsets = [0, 64], sizes = [8, 64], strides = [1, 1]} : vector<8x192xf32> to vector<8x64xf32>
    %35 = arith.mulf %34, %16 : vector<8x64xf32>
    %36 = vector.extract_strided_slice %31 {offsets = [0, 0], sizes = [8, 64], strides = [1, 1]} : vector<8x192xf32> to vector<8x64xf32>
    %37 = arith.mulf %36, %33 : vector<8x64xf32>
    %38 = arith.addf %35, %37 : vector<8x64xf32>
    %39 = vector.extract_strided_slice %31 {offsets = [0, 128], sizes = [8, 64], strides = [1, 1]} : vector<8x192xf32> to vector<8x64xf32>
    %40 = math.tanh %38 : vector<8x64xf32>
    %41 = arith.mulf %39, %40 : vector<8x64xf32>
    %c0_21 = arith.constant 0 : index
    %c0_22 = arith.constant 0 : index
    %c0_23 = arith.constant 0 : index
    %42 = vector.load %arg12[%c0_21, %c0_22, %c0_23] : memref<8x8x64xf32, #tpu.memory_space<vmem>>, vector<1x8x64xf32>
    %43 = vector.shape_cast %42 : vector<1x8x64xf32> to vector<8x64xf32>
    %44 = vector.shape_cast %41 : vector<8x64xf32> to vector<1x8x64xf32>
    tpu.vector_store %arg12[%c0_21, %c0_22, %c0_23], %44 {strides = array<i32>} : memref<8x8x64xf32, #tpu.memory_space<vmem>>, vector<1x8x64xf32>,
    %45 = arith.truncf %41 : vector<8x64xf32> to vector<8x64xbf16>
    %cst_24 = arith.constant dense<0.000000e+00> : vector<8x256xf32>
    %46 = tpu.matmul %45, %17, %cst_24 {dimension_numbers = #tpu.dot_dimension_numbers<[1], [0], [0], [1], [0, 0, 1, 1], [], []>} : vector<8x64xbf16>, vector<64x256xbf16>, vector<8x256xf32> -> vector<8x256xf32>
    %47 = vector.extract_strided_slice %3 {offsets = [1, 0, 0], sizes = [1, 8, 256], strides = [1, 1, 1]} : vector<8x8x256xf32> to vector<1x8x256xf32>
    %48 = vector.shape_cast %47 : vector<1x8x256xf32> to vector<8x256xf32>
    %49 = vector.extract_strided_slice %6 {offsets = [6, 0, 0], sizes = [1, 8, 256], strides = [1, 1, 1]} : vector<8x8x256xf32> to vector<1x8x256xf32>
    %50 = vector.shape_cast %49 : vector<1x8x256xf32> to vector<8x256xf32>
    %51 = arith.addf %48, %50 : vector<8x256xf32>
    %52 = arith.addf %51, %46 : vector<8x256xf32>
    %53 = vector.extract_strided_slice %52 {offsets = [0, 0], sizes = [8, 192], strides = [1, 1]} : vector<8x256xf32> to vector<8x192xf32>
    %54 = arith.negf %53 : vector<8x192xf32>
    %55 = math.exp %54 : vector<8x192xf32>
    %cst_25 = arith.constant 1.000000e+00 : f32
    %56 = vector.broadcast %cst_25 : f32 to vector<8x192xf32>
    %57 = arith.addf %56, %55 : vector<8x192xf32>
    %58 = arith.divf %56, %57 : vector<8x192xf32>
    %59 = vector.extract_strided_slice %52 {offsets = [0, 192], sizes = [8, 64], strides = [1, 1]} : vector<8x256xf32> to vector<8x64xf32>
    %60 = math.tanh %59 : vector<8x64xf32>
    %61 = vector.extract_strided_slice %58 {offsets = [0, 64], sizes = [8, 64], strides = [1, 1]} : vector<8x192xf32> to vector<8x64xf32>
    %62 = arith.mulf %61, %38 : vector<8x64xf32>
    %63 = vector.extract_strided_slice %58 {offsets = [0, 0], sizes = [8, 64], strides = [1, 1]} : vector<8x192xf32> to vector<8x64xf32>
    %64 = arith.mulf %63, %60 : vector<8x64xf32>
    %65 = arith.addf %62, %64 : vector<8x64xf32>
    %66 = vector.extract_strided_slice %58 {offsets = [0, 128], sizes = [8, 64], strides = [1, 1]} : vector<8x192xf32> to vector<8x64xf32>
    %67 = math.tanh %65 : vector<8x64xf32>
    %68 = arith.mulf %66, %67 : vector<8x64xf32>
    %c1_26 = arith.constant 1 : index
    %c0_27 = arith.constant 0 : index
    %c0_28 = arith.constant 0 : index
    %69 = vector.load %arg12[%c1_26, %c0_27, %c0_28] : memref<8x8x64xf32, #tpu.memory_space<vmem>>, vector<1x8x64xf32>
    %70 = vector.shape_cast %69 : vector<1x8x64xf32> to vector<8x64xf32>
    %71 = vector.shape_cast %68 : vector<8x64xf32> to vector<1x8x64xf32>
    tpu.vector_store %arg12[%c1_26, %c0_27, %c0_28], %71 {strides = array<i32>} : memref<8x8x64xf32, #tpu.memory_space<vmem>>, vector<1x8x64xf32>,
    %72 = arith.truncf %68 : vector<8x64xf32> to vector<8x64xbf16>
    %cst_29 = arith.constant dense<0.000000e+00> : vector<8x256xf32>
    %73 = tpu.matmul %72, %17, %cst_29 {dimension_numbers = #tpu.dot_dimension_numbers<[1], [0], [0], [1], [0, 0, 1, 1], [], []>} : vector<8x64xbf16>, vector<64x256xbf16>, vector<8x256xf32> -> vector<8x256xf32>
    %74 = vector.extract_strided_slice %3 {offsets = [2, 0, 0], sizes = [1, 8, 256], strides = [1, 1, 1]} : vector<8x8x256xf32> to vector<1x8x256xf32>
    %75 = vector.shape_cast %74 : vector<1x8x256xf32> to vector<8x256xf32>
    %76 = vector.extract_strided_slice %6 {offsets = [5, 0, 0], sizes = [1, 8, 256], strides = [1, 1, 1]} : vector<8x8x256xf32> to vector<1x8x256xf32>
    %77 = vector.shape_cast %76 : vector<1x8x256xf32> to vector<8x256xf32>
    %78 = arith.addf %75, %77 : vector<8x256xf32>
    %79 = arith.addf %78, %73 : vector<8x256xf32>
    %80 = vector.extract_strided_slice %79 {offsets = [0, 0], sizes = [8, 192], strides = [1, 1]} : vector<8x256xf32> to vector<8x192xf32>
    %81 = arith.negf %80 : vector<8x192xf32>
    %82 = math.exp %81 : vector<8x192xf32>
    %cst_30 = arith.constant 1.000000e+00 : f32
    %83 = vector.broadcast %cst_30 : f32 to vector<8x192xf32>
    %84 = arith.addf %83, %82 : vector<8x192xf32>
    %85 = arith.divf %83, %84 : vector<8x192xf32>
    %86 = vector.extract_strided_slice %79 {offsets = [0, 192], sizes = [8, 64], strides = [1, 1]} : vector<8x256xf32> to vector<8x64xf32>
    %87 = math.tanh %86 : vector<8x64xf32>
    %88 = vector.extract_strided_slice %85 {offsets = [0, 64], sizes = [8, 64], strides = [1, 1]} : vector<8x192xf32> to vector<8x64xf32>
    %89 = arith.mulf %88, %65 : vector<8x64xf32>
    %90 = vector.extract_strided_slice %85 {offsets = [0, 0], sizes = [8, 64], strides = [1, 1]} : vector<8x192xf32> to vector<8x64xf32>
    %91 = arith.mulf %90, %87 : vector<8x64xf32>
    %92 = arith.addf %89, %91 : vector<8x64xf32>
    %93 = vector.extract_strided_slice %85 {offsets = [0, 128], sizes = [8, 64], strides = [1, 1]} : vector<8x192xf32> to vector<8x64xf32>
    %94 = math.tanh %92 : vector<8x64xf32>
    %95 = arith.mulf %93, %94 : vector<8x64xf32>
    %c2 = arith.constant 2 : index
    %c0_31 = arith.constant 0 : index
    %c0_32 = arith.constant 0 : index
    %96 = vector.load %arg12[%c2, %c0_31, %c0_32] : memref<8x8x64xf32, #tpu.memory_space<vmem>>, vector<1x8x64xf32>
    %97 = vector.shape_cast %96 : vector<1x8x64xf32> to vector<8x64xf32>
    %98 = vector.shape_cast %95 : vector<8x64xf32> to vector<1x8x64xf32>
    tpu.vector_store %arg12[%c2, %c0_31, %c0_32], %98 {strides = array<i32>} : memref<8x8x64xf32, #tpu.memory_space<vmem>>, vector<1x8x64xf32>,
    %99 = arith.truncf %95 : vector<8x64xf32> to vector<8x64xbf16>
    %cst_33 = arith.constant dense<0.000000e+00> : vector<8x256xf32>
    %100 = tpu.matmul %99, %17, %cst_33 {dimension_numbers = #tpu.dot_dimension_numbers<[1], [0], [0], [1], [0, 0, 1, 1], [], []>} : vector<8x64xbf16>, vector<64x256xbf16>, vector<8x256xf32> -> vector<8x256xf32>
    %101 = vector.extract_strided_slice %3 {offsets = [3, 0, 0], sizes = [1, 8, 256], strides = [1, 1, 1]} : vector<8x8x256xf32> to vector<1x8x256xf32>
    %102 = vector.shape_cast %101 : vector<1x8x256xf32> to vector<8x256xf32>
    %103 = vector.extract_strided_slice %6 {offsets = [4, 0, 0], sizes = [1, 8, 256], strides = [1, 1, 1]} : vector<8x8x256xf32> to vector<1x8x256xf32>
    %104 = vector.shape_cast %103 : vector<1x8x256xf32> to vector<8x256xf32>
    %105 = arith.addf %102, %104 : vector<8x256xf32>
    %106 = arith.addf %105, %100 : vector<8x256xf32>
    %107 = vector.extract_strided_slice %106 {offsets = [0, 0], sizes = [8, 192], strides = [1, 1]} : vector<8x256xf32> to vector<8x192xf32>
    %108 = arith.negf %107 : vector<8x192xf32>
    %109 = math.exp %108 : vector<8x192xf32>
    %cst_34 = arith.constant 1.000000e+00 : f32
    %110 = vector.broadcast %cst_34 : f32 to vector<8x192xf32>
    %111 = arith.addf %110, %109 : vector<8x192xf32>
    %112 = arith.divf %110, %111 : vector<8x192xf32>
    %113 = vector.extract_strided_slice %106 {offsets = [0, 192], sizes = [8, 64], strides = [1, 1]} : vector<8x256xf32> to vector<8x64xf32>
    %114 = math.tanh %113 : vector<8x64xf32>
    %115 = vector.extract_strided_slice %112 {offsets = [0, 64], sizes = [8, 64], strides = [1, 1]} : vector<8x192xf32> to vector<8x64xf32>
    %116 = arith.mulf %115, %92 : vector<8x64xf32>
    %117 = vector.extract_strided_slice %112 {offsets = [0, 0], sizes = [8, 64], strides = [1, 1]} : vector<8x192xf32> to vector<8x64xf32>
    %118 = arith.mulf %117, %114 : vector<8x64xf32>
    %119 = arith.addf %116, %118 : vector<8x64xf32>
    %120 = vector.extract_strided_slice %112 {offsets = [0, 128], sizes = [8, 64], strides = [1, 1]} : vector<8x192xf32> to vector<8x64xf32>
    %121 = math.tanh %119 : vector<8x64xf32>
    %122 = arith.mulf %120, %121 : vector<8x64xf32>
    %c3 = arith.constant 3 : index
    %c0_35 = arith.constant 0 : index
    %c0_36 = arith.constant 0 : index
    %123 = vector.load %arg12[%c3, %c0_35, %c0_36] : memref<8x8x64xf32, #tpu.memory_space<vmem>>, vector<1x8x64xf32>
    %124 = vector.shape_cast %123 : vector<1x8x64xf32> to vector<8x64xf32>
    %125 = vector.shape_cast %122 : vector<8x64xf32> to vector<1x8x64xf32>
    tpu.vector_store %arg12[%c3, %c0_35, %c0_36], %125 {strides = array<i32>} : memref<8x8x64xf32, #tpu.memory_space<vmem>>, vector<1x8x64xf32>,
    %126 = arith.truncf %122 : vector<8x64xf32> to vector<8x64xbf16>
    %cst_37 = arith.constant dense<0.000000e+00> : vector<8x256xf32>
    %127 = tpu.matmul %126, %17, %cst_37 {dimension_numbers = #tpu.dot_dimension_numbers<[1], [0], [0], [1], [0, 0, 1, 1], [], []>} : vector<8x64xbf16>, vector<64x256xbf16>, vector<8x256xf32> -> vector<8x256xf32>
    %128 = vector.extract_strided_slice %3 {offsets = [4, 0, 0], sizes = [1, 8, 256], strides = [1, 1, 1]} : vector<8x8x256xf32> to vector<1x8x256xf32>
    %129 = vector.shape_cast %128 : vector<1x8x256xf32> to vector<8x256xf32>
    %130 = vector.extract_strided_slice %6 {offsets = [3, 0, 0], sizes = [1, 8, 256], strides = [1, 1, 1]} : vector<8x8x256xf32> to vector<1x8x256xf32>
    %131 = vector.shape_cast %130 : vector<1x8x256xf32> to vector<8x256xf32>
    %132 = arith.addf %129, %131 : vector<8x256xf32>
    %133 = arith.addf %132, %127 : vector<8x256xf32>
    %134 = vector.extract_strided_slice %133 {offsets = [0, 0], sizes = [8, 192], strides = [1, 1]} : vector<8x256xf32> to vector<8x192xf32>
    %135 = arith.negf %134 : vector<8x192xf32>
    %136 = math.exp %135 : vector<8x192xf32>
    %cst_38 = arith.constant 1.000000e+00 : f32
    %137 = vector.broadcast %cst_38 : f32 to vector<8x192xf32>
    %138 = arith.addf %137, %136 : vector<8x192xf32>
    %139 = arith.divf %137, %138 : vector<8x192xf32>
    %140 = vector.extract_strided_slice %133 {offsets = [0, 192], sizes = [8, 64], strides = [1, 1]} : vector<8x256xf32> to vector<8x64xf32>
    %141 = math.tanh %140 : vector<8x64xf32>
    %142 = vector.extract_strided_slice %139 {offsets = [0, 64], sizes = [8, 64], strides = [1, 1]} : vector<8x192xf32> to vector<8x64xf32>
    %143 = arith.mulf %142, %119 : vector<8x64xf32>
    %144 = vector.extract_strided_slice %139 {offsets = [0, 0], sizes = [8, 64], strides = [1, 1]} : vector<8x192xf32> to vector<8x64xf32>
    %145 = arith.mulf %144, %141 : vector<8x64xf32>
    %146 = arith.addf %143, %145 : vector<8x64xf32>
    %147 = vector.extract_strided_slice %139 {offsets = [0, 128], sizes = [8, 64], strides = [1, 1]} : vector<8x192xf32> to vector<8x64xf32>
    %148 = math.tanh %146 : vector<8x64xf32>
    %149 = arith.mulf %147, %148 : vector<8x64xf32>
    %c4 = arith.constant 4 : index
    %c0_39 = arith.constant 0 : index
    %c0_40 = arith.constant 0 : index
    %150 = vector.load %arg12[%c4, %c0_39, %c0_40] : memref<8x8x64xf32, #tpu.memory_space<vmem>>, vector<1x8x64xf32>
    %151 = vector.shape_cast %150 : vector<1x8x64xf32> to vector<8x64xf32>
    %152 = vector.shape_cast %149 : vector<8x64xf32> to vector<1x8x64xf32>
    tpu.vector_store %arg12[%c4, %c0_39, %c0_40], %152 {strides = array<i32>} : memref<8x8x64xf32, #tpu.memory_space<vmem>>, vector<1x8x64xf32>,
    %153 = arith.truncf %149 : vector<8x64xf32> to vector<8x64xbf16>
    %cst_41 = arith.constant dense<0.000000e+00> : vector<8x256xf32>
    %154 = tpu.matmul %153, %17, %cst_41 {dimension_numbers = #tpu.dot_dimension_numbers<[1], [0], [0], [1], [0, 0, 1, 1], [], []>} : vector<8x64xbf16>, vector<64x256xbf16>, vector<8x256xf32> -> vector<8x256xf32>
    %155 = vector.extract_strided_slice %3 {offsets = [5, 0, 0], sizes = [1, 8, 256], strides = [1, 1, 1]} : vector<8x8x256xf32> to vector<1x8x256xf32>
    %156 = vector.shape_cast %155 : vector<1x8x256xf32> to vector<8x256xf32>
    %157 = vector.extract_strided_slice %6 {offsets = [2, 0, 0], sizes = [1, 8, 256], strides = [1, 1, 1]} : vector<8x8x256xf32> to vector<1x8x256xf32>
    %158 = vector.shape_cast %157 : vector<1x8x256xf32> to vector<8x256xf32>
    %159 = arith.addf %156, %158 : vector<8x256xf32>
    %160 = arith.addf %159, %154 : vector<8x256xf32>
    %161 = vector.extract_strided_slice %160 {offsets = [0, 0], sizes = [8, 192], strides = [1, 1]} : vector<8x256xf32> to vector<8x192xf32>
    %162 = arith.negf %161 : vector<8x192xf32>
    %163 = math.exp %162 : vector<8x192xf32>
    %cst_42 = arith.constant 1.000000e+00 : f32
    %164 = vector.broadcast %cst_42 : f32 to vector<8x192xf32>
    %165 = arith.addf %164, %163 : vector<8x192xf32>
    %166 = arith.divf %164, %165 : vector<8x192xf32>
    %167 = vector.extract_strided_slice %160 {offsets = [0, 192], sizes = [8, 64], strides = [1, 1]} : vector<8x256xf32> to vector<8x64xf32>
    %168 = math.tanh %167 : vector<8x64xf32>
    %169 = vector.extract_strided_slice %166 {offsets = [0, 64], sizes = [8, 64], strides = [1, 1]} : vector<8x192xf32> to vector<8x64xf32>
    %170 = arith.mulf %169, %146 : vector<8x64xf32>
    %171 = vector.extract_strided_slice %166 {offsets = [0, 0], sizes = [8, 64], strides = [1, 1]} : vector<8x192xf32> to vector<8x64xf32>
    %172 = arith.mulf %171, %168 : vector<8x64xf32>
    %173 = arith.addf %170, %172 : vector<8x64xf32>
    %174 = vector.extract_strided_slice %166 {offsets = [0, 128], sizes = [8, 64], strides = [1, 1]} : vector<8x192xf32> to vector<8x64xf32>
    %175 = math.tanh %173 : vector<8x64xf32>
    %176 = arith.mulf %174, %175 : vector<8x64xf32>
    %c5 = arith.constant 5 : index
    %c0_43 = arith.constant 0 : index
    %c0_44 = arith.constant 0 : index
    %177 = vector.load %arg12[%c5, %c0_43, %c0_44] : memref<8x8x64xf32, #tpu.memory_space<vmem>>, vector<1x8x64xf32>
    %178 = vector.shape_cast %177 : vector<1x8x64xf32> to vector<8x64xf32>
    %179 = vector.shape_cast %176 : vector<8x64xf32> to vector<1x8x64xf32>
    tpu.vector_store %arg12[%c5, %c0_43, %c0_44], %179 {strides = array<i32>} : memref<8x8x64xf32, #tpu.memory_space<vmem>>, vector<1x8x64xf32>,
    %180 = arith.truncf %176 : vector<8x64xf32> to vector<8x64xbf16>
    %cst_45 = arith.constant dense<0.000000e+00> : vector<8x256xf32>
    %181 = tpu.matmul %180, %17, %cst_45 {dimension_numbers = #tpu.dot_dimension_numbers<[1], [0], [0], [1], [0, 0, 1, 1], [], []>} : vector<8x64xbf16>, vector<64x256xbf16>, vector<8x256xf32> -> vector<8x256xf32>
    %182 = vector.extract_strided_slice %3 {offsets = [6, 0, 0], sizes = [1, 8, 256], strides = [1, 1, 1]} : vector<8x8x256xf32> to vector<1x8x256xf32>
    %183 = vector.shape_cast %182 : vector<1x8x256xf32> to vector<8x256xf32>
    %184 = vector.extract_strided_slice %6 {offsets = [1, 0, 0], sizes = [1, 8, 256], strides = [1, 1, 1]} : vector<8x8x256xf32> to vector<1x8x256xf32>
    %185 = vector.shape_cast %184 : vector<1x8x256xf32> to vector<8x256xf32>
    %186 = arith.addf %183, %185 : vector<8x256xf32>
    %187 = arith.addf %186, %181 : vector<8x256xf32>
    %188 = vector.extract_strided_slice %187 {offsets = [0, 0], sizes = [8, 192], strides = [1, 1]} : vector<8x256xf32> to vector<8x192xf32>
    %189 = arith.negf %188 : vector<8x192xf32>
    %190 = math.exp %189 : vector<8x192xf32>
    %cst_46 = arith.constant 1.000000e+00 : f32
    %191 = vector.broadcast %cst_46 : f32 to vector<8x192xf32>
    %192 = arith.addf %191, %190 : vector<8x192xf32>
    %193 = arith.divf %191, %192 : vector<8x192xf32>
    %194 = vector.extract_strided_slice %187 {offsets = [0, 192], sizes = [8, 64], strides = [1, 1]} : vector<8x256xf32> to vector<8x64xf32>
    %195 = math.tanh %194 : vector<8x64xf32>
    %196 = vector.extract_strided_slice %193 {offsets = [0, 64], sizes = [8, 64], strides = [1, 1]} : vector<8x192xf32> to vector<8x64xf32>
    %197 = arith.mulf %196, %173 : vector<8x64xf32>
    %198 = vector.extract_strided_slice %193 {offsets = [0, 0], sizes = [8, 64], strides = [1, 1]} : vector<8x192xf32> to vector<8x64xf32>
    %199 = arith.mulf %198, %195 : vector<8x64xf32>
    %200 = arith.addf %197, %199 : vector<8x64xf32>
    %201 = vector.extract_strided_slice %193 {offsets = [0, 128], sizes = [8, 64], strides = [1, 1]} : vector<8x192xf32> to vector<8x64xf32>
    %202 = math.tanh %200 : vector<8x64xf32>
    %203 = arith.mulf %201, %202 : vector<8x64xf32>
    %c6 = arith.constant 6 : index
    %c0_47 = arith.constant 0 : index
    %c0_48 = arith.constant 0 : index
    %204 = vector.load %arg12[%c6, %c0_47, %c0_48] : memref<8x8x64xf32, #tpu.memory_space<vmem>>, vector<1x8x64xf32>
    %205 = vector.shape_cast %204 : vector<1x8x64xf32> to vector<8x64xf32>
    %206 = vector.shape_cast %203 : vector<8x64xf32> to vector<1x8x64xf32>
    tpu.vector_store %arg12[%c6, %c0_47, %c0_48], %206 {strides = array<i32>} : memref<8x8x64xf32, #tpu.memory_space<vmem>>, vector<1x8x64xf32>,
    %207 = arith.truncf %203 : vector<8x64xf32> to vector<8x64xbf16>
    %cst_49 = arith.constant dense<0.000000e+00> : vector<8x256xf32>
    %208 = tpu.matmul %207, %17, %cst_49 {dimension_numbers = #tpu.dot_dimension_numbers<[1], [0], [0], [1], [0, 0, 1, 1], [], []>} : vector<8x64xbf16>, vector<64x256xbf16>, vector<8x256xf32> -> vector<8x256xf32>
    %209 = vector.extract_strided_slice %3 {offsets = [7, 0, 0], sizes = [1, 8, 256], strides = [1, 1, 1]} : vector<8x8x256xf32> to vector<1x8x256xf32>
    %210 = vector.shape_cast %209 : vector<1x8x256xf32> to vector<8x256xf32>
    %211 = vector.extract_strided_slice %6 {offsets = [0, 0, 0], sizes = [1, 8, 256], strides = [1, 1, 1]} : vector<8x8x256xf32> to vector<1x8x256xf32>
    %212 = vector.shape_cast %211 : vector<1x8x256xf32> to vector<8x256xf32>
    %213 = arith.addf %210, %212 : vector<8x256xf32>
    %214 = arith.addf %213, %208 : vector<8x256xf32>
    %215 = vector.extract_strided_slice %214 {offsets = [0, 0], sizes = [8, 192], strides = [1, 1]} : vector<8x256xf32> to vector<8x192xf32>
    %216 = arith.negf %215 : vector<8x192xf32>
    %217 = math.exp %216 : vector<8x192xf32>
    %cst_50 = arith.constant 1.000000e+00 : f32
    %218 = vector.broadcast %cst_50 : f32 to vector<8x192xf32>
    %219 = arith.addf %218, %217 : vector<8x192xf32>
    %220 = arith.divf %218, %219 : vector<8x192xf32>
    %221 = vector.extract_strided_slice %214 {offsets = [0, 192], sizes = [8, 64], strides = [1, 1]} : vector<8x256xf32> to vector<8x64xf32>
    %222 = math.tanh %221 : vector<8x64xf32>
    %223 = vector.extract_strided_slice %220 {offsets = [0, 64], sizes = [8, 64], strides = [1, 1]} : vector<8x192xf32> to vector<8x64xf32>
    %224 = arith.mulf %223, %200 : vector<8x64xf32>
    %225 = vector.extract_strided_slice %220 {offsets = [0, 0], sizes = [8, 64], strides = [1, 1]} : vector<8x192xf32> to vector<8x64xf32>
    %226 = arith.mulf %225, %222 : vector<8x64xf32>
    %227 = arith.addf %224, %226 : vector<8x64xf32>
    %228 = vector.extract_strided_slice %220 {offsets = [0, 128], sizes = [8, 64], strides = [1, 1]} : vector<8x192xf32> to vector<8x64xf32>
    %229 = math.tanh %227 : vector<8x64xf32>
    %230 = arith.mulf %228, %229 : vector<8x64xf32>
    %c7 = arith.constant 7 : index
    %c0_51 = arith.constant 0 : index
    %c0_52 = arith.constant 0 : index
    %231 = vector.load %arg12[%c7, %c0_51, %c0_52] : memref<8x8x64xf32, #tpu.memory_space<vmem>>, vector<1x8x64xf32>
    %232 = vector.shape_cast %231 : vector<1x8x64xf32> to vector<8x64xf32>
    %233 = vector.shape_cast %230 : vector<8x64xf32> to vector<1x8x64xf32>
    tpu.vector_store %arg12[%c7, %c0_51, %c0_52], %233 {strides = array<i32>} : memref<8x8x64xf32, #tpu.memory_space<vmem>>, vector<1x8x64xf32>,
    %c0_53 = arith.constant 0 : index
    %c0_54 = arith.constant 0 : index
    %c0_55 = arith.constant 0 : index
    %234 = vector.load %arg12[%c0_53, %c0_54, %c0_55] : memref<8x8x64xf32, #tpu.memory_space<vmem>>, vector<8x8x64xf32>
    %235 = vector.shape_cast %234 : vector<8x8x64xf32> to vector<64x64xf32>
    %c0_56 = arith.constant 0 : index
    %c0_57 = arith.constant 0 : index
    %236 = vector.load %arg6[%c0_56, %c0_57] : memref<64x256xf32, #tpu.memory_space<vmem>>, vector<64x256xf32>
    %cst_58 = arith.constant dense<0.000000e+00> : vector<64x256xf32>
    %237 = tpu.matmul %235, %236, %cst_58 {dimension_numbers = #tpu.dot_dimension_numbers<[1], [0], [0], [1], [0, 0, 1, 1], [], []>} : vector<64x64xf32>, vector<64x256xf32>, vector<64x256xf32> -> vector<64x256xf32>
    %238 = vector.shape_cast %237 : vector<64x256xf32> to vector<8x8x256xf32>
    %c0_59 = arith.constant 0 : index
    %c0_60 = arith.constant 0 : index
    %239 = vector.load %arg7[%c0_59, %c0_60] : memref<64x256xf32, #tpu.memory_space<vmem>>, vector<64x256xf32>
    %cst_61 = arith.constant dense<0.000000e+00> : vector<64x256xf32>
    %240 = tpu.matmul %235, %239, %cst_61 {dimension_numbers = #tpu.dot_dimension_numbers<[1], [0], [0], [1], [0, 0, 1, 1], [], []>} : vector<64x64xf32>, vector<64x256xf32>, vector<64x256xf32> -> vector<64x256xf32>
    %241 = vector.shape_cast %240 : vector<64x256xf32> to vector<8x8x256xf32>
    %c2_62 = arith.constant 2 : index
    %c0_63 = arith.constant 0 : index
    %c0_64 = arith.constant 0 : index
    %242 = vector.load %arg1[%c2_62, %c0_63, %c0_64] : memref<4x8x32xf32, #tpu.memory_space<vmem>>, vector<1x8x32xf32>
    %243 = vector.shape_cast %242 : vector<1x8x32xf32> to vector<8x32xf32>
    %c3_65 = arith.constant 3 : index
    %c0_66 = arith.constant 0 : index
    %c0_67 = arith.constant 0 : index
    %244 = vector.load %arg1[%c3_65, %c0_66, %c0_67] : memref<4x8x32xf32, #tpu.memory_space<vmem>>, vector<1x8x32xf32>
    %245 = vector.shape_cast %244 : vector<1x8x32xf32> to vector<8x32xf32>
    %246 = tpu.concatenate %243, %245 in 1 : vector<8x32xf32>, vector<8x32xf32> -> vector<8x64xf32>
    %c2_68 = arith.constant 2 : index
    %c0_69 = arith.constant 0 : index
    %c0_70 = arith.constant 0 : index
    %247 = vector.load %arg2[%c2_68, %c0_69, %c0_70] : memref<4x8x32xf32, #tpu.memory_space<vmem>>, vector<1x8x32xf32>
    %248 = vector.shape_cast %247 : vector<1x8x32xf32> to vector<8x32xf32>
    %c3_71 = arith.constant 3 : index
    %c0_72 = arith.constant 0 : index
    %c0_73 = arith.constant 0 : index
    %249 = vector.load %arg2[%c3_71, %c0_72, %c0_73] : memref<4x8x32xf32, #tpu.memory_space<vmem>>, vector<1x8x32xf32>
    %250 = vector.shape_cast %249 : vector<1x8x32xf32> to vector<8x32xf32>
    %251 = tpu.concatenate %248, %250 in 1 : vector<8x32xf32>, vector<8x32xf32> -> vector<8x64xf32>
    %c0_74 = arith.constant 0 : index
    %c0_75 = arith.constant 0 : index
    %252 = vector.load %arg8[%c0_74, %c0_75] : memref<64x256xbf16, #tpu.memory_space<vmem>>, vector<64x256xbf16>
    %253 = arith.truncf %246 : vector<8x64xf32> to vector<8x64xbf16>
    %cst_76 = arith.constant dense<0.000000e+00> : vector<8x256xf32>
    %254 = tpu.matmul %253, %252, %cst_76 {dimension_numbers = #tpu.dot_dimension_numbers<[1], [0], [0], [1], [0, 0, 1, 1], [], []>} : vector<8x64xbf16>, vector<64x256xbf16>, vector<8x256xf32> -> vector<8x256xf32>
    %255 = vector.extract_strided_slice %238 {offsets = [0, 0, 0], sizes = [1, 8, 256], strides = [1, 1, 1]} : vector<8x8x256xf32> to vector<1x8x256xf32>
    %256 = vector.shape_cast %255 : vector<1x8x256xf32> to vector<8x256xf32>
    %257 = vector.extract_strided_slice %241 {offsets = [7, 0, 0], sizes = [1, 8, 256], strides = [1, 1, 1]} : vector<8x8x256xf32> to vector<1x8x256xf32>
    %258 = vector.shape_cast %257 : vector<1x8x256xf32> to vector<8x256xf32>
    %259 = arith.addf %256, %258 : vector<8x256xf32>
    %260 = arith.addf %259, %254 : vector<8x256xf32>
    %261 = vector.extract_strided_slice %260 {offsets = [0, 0], sizes = [8, 192], strides = [1, 1]} : vector<8x256xf32> to vector<8x192xf32>
    %262 = arith.negf %261 : vector<8x192xf32>
    %263 = math.exp %262 : vector<8x192xf32>
    %cst_77 = arith.constant 1.000000e+00 : f32
    %264 = vector.broadcast %cst_77 : f32 to vector<8x192xf32>
    %265 = arith.addf %264, %263 : vector<8x192xf32>
    %266 = arith.divf %264, %265 : vector<8x192xf32>
    %267 = vector.extract_strided_slice %260 {offsets = [0, 192], sizes = [8, 64], strides = [1, 1]} : vector<8x256xf32> to vector<8x64xf32>
    %268 = math.tanh %267 : vector<8x64xf32>
    %269 = vector.extract_strided_slice %266 {offsets = [0, 64], sizes = [8, 64], strides = [1, 1]} : vector<8x192xf32> to vector<8x64xf32>
    %270 = arith.mulf %269, %251 : vector<8x64xf32>
    %271 = vector.extract_strided_slice %266 {offsets = [0, 0], sizes = [8, 64], strides = [1, 1]} : vector<8x192xf32> to vector<8x64xf32>
    %272 = arith.mulf %271, %268 : vector<8x64xf32>
    %273 = arith.addf %270, %272 : vector<8x64xf32>
    %274 = vector.extract_strided_slice %266 {offsets = [0, 128], sizes = [8, 64], strides = [1, 1]} : vector<8x192xf32> to vector<8x64xf32>
    %275 = math.tanh %273 : vector<8x64xf32>
    %276 = arith.mulf %274, %275 : vector<8x64xf32>
    %277 = arith.truncf %276 : vector<8x64xf32> to vector<8x64xbf16>
    %cst_78 = arith.constant dense<0.000000e+00> : vector<8x256xf32>
    %278 = tpu.matmul %277, %252, %cst_78 {dimension_numbers = #tpu.dot_dimension_numbers<[1], [0], [0], [1], [0, 0, 1, 1], [], []>} : vector<8x64xbf16>, vector<64x256xbf16>, vector<8x256xf32> -> vector<8x256xf32>
    %279 = vector.extract_strided_slice %238 {offsets = [1, 0, 0], sizes = [1, 8, 256], strides = [1, 1, 1]} : vector<8x8x256xf32> to vector<1x8x256xf32>
    %280 = vector.shape_cast %279 : vector<1x8x256xf32> to vector<8x256xf32>
    %281 = vector.extract_strided_slice %241 {offsets = [6, 0, 0], sizes = [1, 8, 256], strides = [1, 1, 1]} : vector<8x8x256xf32> to vector<1x8x256xf32>
    %282 = vector.shape_cast %281 : vector<1x8x256xf32> to vector<8x256xf32>
    %283 = arith.addf %280, %282 : vector<8x256xf32>
    %284 = arith.addf %283, %278 : vector<8x256xf32>
    %285 = vector.extract_strided_slice %284 {offsets = [0, 0], sizes = [8, 192], strides = [1, 1]} : vector<8x256xf32> to vector<8x192xf32>
    %286 = arith.negf %285 : vector<8x192xf32>
    %287 = math.exp %286 : vector<8x192xf32>
    %cst_79 = arith.constant 1.000000e+00 : f32
    %288 = vector.broadcast %cst_79 : f32 to vector<8x192xf32>
    %289 = arith.addf %288, %287 : vector<8x192xf32>
    %290 = arith.divf %288, %289 : vector<8x192xf32>
    %291 = vector.extract_strided_slice %284 {offsets = [0, 192], sizes = [8, 64], strides = [1, 1]} : vector<8x256xf32> to vector<8x64xf32>
    %292 = math.tanh %291 : vector<8x64xf32>
    %293 = vector.extract_strided_slice %290 {offsets = [0, 64], sizes = [8, 64], strides = [1, 1]} : vector<8x192xf32> to vector<8x64xf32>
    %294 = arith.mulf %293, %273 : vector<8x64xf32>
    %295 = vector.extract_strided_slice %290 {offsets = [0, 0], sizes = [8, 64], strides = [1, 1]} : vector<8x192xf32> to vector<8x64xf32>
    %296 = arith.mulf %295, %292 : vector<8x64xf32>
    %297 = arith.addf %294, %296 : vector<8x64xf32>
    %298 = vector.extract_strided_slice %290 {offsets = [0, 128], sizes = [8, 64], strides = [1, 1]} : vector<8x192xf32> to vector<8x64xf32>
    %299 = math.tanh %297 : vector<8x64xf32>
    %300 = arith.mulf %298, %299 : vector<8x64xf32>
    %301 = arith.truncf %300 : vector<8x64xf32> to vector<8x64xbf16>
    %cst_80 = arith.constant dense<0.000000e+00> : vector<8x256xf32>
    %302 = tpu.matmul %301, %252, %cst_80 {dimension_numbers = #tpu.dot_dimension_numbers<[1], [0], [0], [1], [0, 0, 1, 1], [], []>} : vector<8x64xbf16>, vector<64x256xbf16>, vector<8x256xf32> -> vector<8x256xf32>
    %303 = vector.extract_strided_slice %238 {offsets = [2, 0, 0], sizes = [1, 8, 256], strides = [1, 1, 1]} : vector<8x8x256xf32> to vector<1x8x256xf32>
    %304 = vector.shape_cast %303 : vector<1x8x256xf32> to vector<8x256xf32>
    %305 = vector.extract_strided_slice %241 {offsets = [5, 0, 0], sizes = [1, 8, 256], strides = [1, 1, 1]} : vector<8x8x256xf32> to vector<1x8x256xf32>
    %306 = vector.shape_cast %305 : vector<1x8x256xf32> to vector<8x256xf32>
    %307 = arith.addf %304, %306 : vector<8x256xf32>
    %308 = arith.addf %307, %302 : vector<8x256xf32>
    %309 = vector.extract_strided_slice %308 {offsets = [0, 0], sizes = [8, 192], strides = [1, 1]} : vector<8x256xf32> to vector<8x192xf32>
    %310 = arith.negf %309 : vector<8x192xf32>
    %311 = math.exp %310 : vector<8x192xf32>
    %cst_81 = arith.constant 1.000000e+00 : f32
    %312 = vector.broadcast %cst_81 : f32 to vector<8x192xf32>
    %313 = arith.addf %312, %311 : vector<8x192xf32>
    %314 = arith.divf %312, %313 : vector<8x192xf32>
    %315 = vector.extract_strided_slice %308 {offsets = [0, 192], sizes = [8, 64], strides = [1, 1]} : vector<8x256xf32> to vector<8x64xf32>
    %316 = math.tanh %315 : vector<8x64xf32>
    %317 = vector.extract_strided_slice %314 {offsets = [0, 64], sizes = [8, 64], strides = [1, 1]} : vector<8x192xf32> to vector<8x64xf32>
    %318 = arith.mulf %317, %297 : vector<8x64xf32>
    %319 = vector.extract_strided_slice %314 {offsets = [0, 0], sizes = [8, 64], strides = [1, 1]} : vector<8x192xf32> to vector<8x64xf32>
    %320 = arith.mulf %319, %316 : vector<8x64xf32>
    %321 = arith.addf %318, %320 : vector<8x64xf32>
    %322 = vector.extract_strided_slice %314 {offsets = [0, 128], sizes = [8, 64], strides = [1, 1]} : vector<8x192xf32> to vector<8x64xf32>
    %323 = math.tanh %321 : vector<8x64xf32>
    %324 = arith.mulf %322, %323 : vector<8x64xf32>
    %325 = arith.truncf %324 : vector<8x64xf32> to vector<8x64xbf16>
    %cst_82 = arith.constant dense<0.000000e+00> : vector<8x256xf32>
    %326 = tpu.matmul %325, %252, %cst_82 {dimension_numbers = #tpu.dot_dimension_numbers<[1], [0], [0], [1], [0, 0, 1, 1], [], []>} : vector<8x64xbf16>, vector<64x256xbf16>, vector<8x256xf32> -> vector<8x256xf32>
    %327 = vector.extract_strided_slice %238 {offsets = [3, 0, 0], sizes = [1, 8, 256], strides = [1, 1, 1]} : vector<8x8x256xf32> to vector<1x8x256xf32>
    %328 = vector.shape_cast %327 : vector<1x8x256xf32> to vector<8x256xf32>
    %329 = vector.extract_strided_slice %241 {offsets = [4, 0, 0], sizes = [1, 8, 256], strides = [1, 1, 1]} : vector<8x8x256xf32> to vector<1x8x256xf32>
    %330 = vector.shape_cast %329 : vector<1x8x256xf32> to vector<8x256xf32>
    %331 = arith.addf %328, %330 : vector<8x256xf32>
    %332 = arith.addf %331, %326 : vector<8x256xf32>
    %333 = vector.extract_strided_slice %332 {offsets = [0, 0], sizes = [8, 192], strides = [1, 1]} : vector<8x256xf32> to vector<8x192xf32>
    %334 = arith.negf %333 : vector<8x192xf32>
    %335 = math.exp %334 : vector<8x192xf32>
    %cst_83 = arith.constant 1.000000e+00 : f32
    %336 = vector.broadcast %cst_83 : f32 to vector<8x192xf32>
    %337 = arith.addf %336, %335 : vector<8x192xf32>
    %338 = arith.divf %336, %337 : vector<8x192xf32>
    %339 = vector.extract_strided_slice %332 {offsets = [0, 192], sizes = [8, 64], strides = [1, 1]} : vector<8x256xf32> to vector<8x64xf32>
    %340 = math.tanh %339 : vector<8x64xf32>
    %341 = vector.extract_strided_slice %338 {offsets = [0, 64], sizes = [8, 64], strides = [1, 1]} : vector<8x192xf32> to vector<8x64xf32>
    %342 = arith.mulf %341, %321 : vector<8x64xf32>
    %343 = vector.extract_strided_slice %338 {offsets = [0, 0], sizes = [8, 64], strides = [1, 1]} : vector<8x192xf32> to vector<8x64xf32>
    %344 = arith.mulf %343, %340 : vector<8x64xf32>
    %345 = arith.addf %342, %344 : vector<8x64xf32>
    %346 = vector.extract_strided_slice %338 {offsets = [0, 128], sizes = [8, 64], strides = [1, 1]} : vector<8x192xf32> to vector<8x64xf32>
    %347 = math.tanh %345 : vector<8x64xf32>
    %348 = arith.mulf %346, %347 : vector<8x64xf32>
    %349 = arith.truncf %348 : vector<8x64xf32> to vector<8x64xbf16>
    %cst_84 = arith.constant dense<0.000000e+00> : vector<8x256xf32>
    %350 = tpu.matmul %349, %252, %cst_84 {dimension_numbers = #tpu.dot_dimension_numbers<[1], [0], [0], [1], [0, 0, 1, 1], [], []>} : vector<8x64xbf16>, vector<64x256xbf16>, vector<8x256xf32> -> vector<8x256xf32>
    %351 = vector.extract_strided_slice %238 {offsets = [4, 0, 0], sizes = [1, 8, 256], strides = [1, 1, 1]} : vector<8x8x256xf32> to vector<1x8x256xf32>
    %352 = vector.shape_cast %351 : vector<1x8x256xf32> to vector<8x256xf32>
    %353 = vector.extract_strided_slice %241 {offsets = [3, 0, 0], sizes = [1, 8, 256], strides = [1, 1, 1]} : vector<8x8x256xf32> to vector<1x8x256xf32>
    %354 = vector.shape_cast %353 : vector<1x8x256xf32> to vector<8x256xf32>
    %355 = arith.addf %352, %354 : vector<8x256xf32>
    %356 = arith.addf %355, %350 : vector<8x256xf32>
    %357 = vector.extract_strided_slice %356 {offsets = [0, 0], sizes = [8, 192], strides = [1, 1]} : vector<8x256xf32> to vector<8x192xf32>
    %358 = arith.negf %357 : vector<8x192xf32>
    %359 = math.exp %358 : vector<8x192xf32>
    %cst_85 = arith.constant 1.000000e+00 : f32
    %360 = vector.broadcast %cst_85 : f32 to vector<8x192xf32>
    %361 = arith.addf %360, %359 : vector<8x192xf32>
    %362 = arith.divf %360, %361 : vector<8x192xf32>
    %363 = vector.extract_strided_slice %356 {offsets = [0, 192], sizes = [8, 64], strides = [1, 1]} : vector<8x256xf32> to vector<8x64xf32>
    %364 = math.tanh %363 : vector<8x64xf32>
    %365 = vector.extract_strided_slice %362 {offsets = [0, 64], sizes = [8, 64], strides = [1, 1]} : vector<8x192xf32> to vector<8x64xf32>
    %366 = arith.mulf %365, %345 : vector<8x64xf32>
    %367 = vector.extract_strided_slice %362 {offsets = [0, 0], sizes = [8, 64], strides = [1, 1]} : vector<8x192xf32> to vector<8x64xf32>
    %368 = arith.mulf %367, %364 : vector<8x64xf32>
    %369 = arith.addf %366, %368 : vector<8x64xf32>
    %370 = vector.extract_strided_slice %362 {offsets = [0, 128], sizes = [8, 64], strides = [1, 1]} : vector<8x192xf32> to vector<8x64xf32>
    %371 = math.tanh %369 : vector<8x64xf32>
    %372 = arith.mulf %370, %371 : vector<8x64xf32>
    %373 = arith.truncf %372 : vector<8x64xf32> to vector<8x64xbf16>
    %cst_86 = arith.constant dense<0.000000e+00> : vector<8x256xf32>
    %374 = tpu.matmul %373, %252, %cst_86 {dimension_numbers = #tpu.dot_dimension_numbers<[1], [0], [0], [1], [0, 0, 1, 1], [], []>} : vector<8x64xbf16>, vector<64x256xbf16>, vector<8x256xf32> -> vector<8x256xf32>
    %375 = vector.extract_strided_slice %238 {offsets = [5, 0, 0], sizes = [1, 8, 256], strides = [1, 1, 1]} : vector<8x8x256xf32> to vector<1x8x256xf32>
    %376 = vector.shape_cast %375 : vector<1x8x256xf32> to vector<8x256xf32>
    %377 = vector.extract_strided_slice %241 {offsets = [2, 0, 0], sizes = [1, 8, 256], strides = [1, 1, 1]} : vector<8x8x256xf32> to vector<1x8x256xf32>
    %378 = vector.shape_cast %377 : vector<1x8x256xf32> to vector<8x256xf32>
    %379 = arith.addf %376, %378 : vector<8x256xf32>
    %380 = arith.addf %379, %374 : vector<8x256xf32>
    %381 = vector.extract_strided_slice %380 {offsets = [0, 0], sizes = [8, 192], strides = [1, 1]} : vector<8x256xf32> to vector<8x192xf32>
    %382 = arith.negf %381 : vector<8x192xf32>
    %383 = math.exp %382 : vector<8x192xf32>
    %cst_87 = arith.constant 1.000000e+00 : f32
    %384 = vector.broadcast %cst_87 : f32 to vector<8x192xf32>
    %385 = arith.addf %384, %383 : vector<8x192xf32>
    %386 = arith.divf %384, %385 : vector<8x192xf32>
    %387 = vector.extract_strided_slice %380 {offsets = [0, 192], sizes = [8, 64], strides = [1, 1]} : vector<8x256xf32> to vector<8x64xf32>
    %388 = math.tanh %387 : vector<8x64xf32>
    %389 = vector.extract_strided_slice %386 {offsets = [0, 64], sizes = [8, 64], strides = [1, 1]} : vector<8x192xf32> to vector<8x64xf32>
    %390 = arith.mulf %389, %369 : vector<8x64xf32>
    %391 = vector.extract_strided_slice %386 {offsets = [0, 0], sizes = [8, 64], strides = [1, 1]} : vector<8x192xf32> to vector<8x64xf32>
    %392 = arith.mulf %391, %388 : vector<8x64xf32>
    %393 = arith.addf %390, %392 : vector<8x64xf32>
    %394 = vector.extract_strided_slice %386 {offsets = [0, 128], sizes = [8, 64], strides = [1, 1]} : vector<8x192xf32> to vector<8x64xf32>
    %395 = math.tanh %393 : vector<8x64xf32>
    %396 = arith.mulf %394, %395 : vector<8x64xf32>
    %397 = arith.truncf %396 : vector<8x64xf32> to vector<8x64xbf16>
    %cst_88 = arith.constant dense<0.000000e+00> : vector<8x256xf32>
    %398 = tpu.matmul %397, %252, %cst_88 {dimension_numbers = #tpu.dot_dimension_numbers<[1], [0], [0], [1], [0, 0, 1, 1], [], []>} : vector<8x64xbf16>, vector<64x256xbf16>, vector<8x256xf32> -> vector<8x256xf32>
    %399 = vector.extract_strided_slice %238 {offsets = [6, 0, 0], sizes = [1, 8, 256], strides = [1, 1, 1]} : vector<8x8x256xf32> to vector<1x8x256xf32>
    %400 = vector.shape_cast %399 : vector<1x8x256xf32> to vector<8x256xf32>
    %401 = vector.extract_strided_slice %241 {offsets = [1, 0, 0], sizes = [1, 8, 256], strides = [1, 1, 1]} : vector<8x8x256xf32> to vector<1x8x256xf32>
    %402 = vector.shape_cast %401 : vector<1x8x256xf32> to vector<8x256xf32>
    %403 = arith.addf %400, %402 : vector<8x256xf32>
    %404 = arith.addf %403, %398 : vector<8x256xf32>
    %405 = vector.extract_strided_slice %404 {offsets = [0, 0], sizes = [8, 192], strides = [1, 1]} : vector<8x256xf32> to vector<8x192xf32>
    %406 = arith.negf %405 : vector<8x192xf32>
    %407 = math.exp %406 : vector<8x192xf32>
    %cst_89 = arith.constant 1.000000e+00 : f32
    %408 = vector.broadcast %cst_89 : f32 to vector<8x192xf32>
    %409 = arith.addf %408, %407 : vector<8x192xf32>
    %410 = arith.divf %408, %409 : vector<8x192xf32>
    %411 = vector.extract_strided_slice %404 {offsets = [0, 192], sizes = [8, 64], strides = [1, 1]} : vector<8x256xf32> to vector<8x64xf32>
    %412 = math.tanh %411 : vector<8x64xf32>
    %413 = vector.extract_strided_slice %410 {offsets = [0, 64], sizes = [8, 64], strides = [1, 1]} : vector<8x192xf32> to vector<8x64xf32>
    %414 = arith.mulf %413, %393 : vector<8x64xf32>
    %415 = vector.extract_strided_slice %410 {offsets = [0, 0], sizes = [8, 64], strides = [1, 1]} : vector<8x192xf32> to vector<8x64xf32>
    %416 = arith.mulf %415, %412 : vector<8x64xf32>
    %417 = arith.addf %414, %416 : vector<8x64xf32>
    %418 = vector.extract_strided_slice %410 {offsets = [0, 128], sizes = [8, 64], strides = [1, 1]} : vector<8x192xf32> to vector<8x64xf32>
    %419 = math.tanh %417 : vector<8x64xf32>
    %420 = arith.mulf %418, %419 : vector<8x64xf32>
    %421 = arith.truncf %420 : vector<8x64xf32> to vector<8x64xbf16>
    %cst_90 = arith.constant dense<0.000000e+00> : vector<8x256xf32>
    %422 = tpu.matmul %421, %252, %cst_90 {dimension_numbers = #tpu.dot_dimension_numbers<[1], [0], [0], [1], [0, 0, 1, 1], [], []>} : vector<8x64xbf16>, vector<64x256xbf16>, vector<8x256xf32> -> vector<8x256xf32>
    %423 = vector.extract_strided_slice %238 {offsets = [7, 0, 0], sizes = [1, 8, 256], strides = [1, 1, 1]} : vector<8x8x256xf32> to vector<1x8x256xf32>
    %424 = vector.shape_cast %423 : vector<1x8x256xf32> to vector<8x256xf32>
    %425 = vector.extract_strided_slice %241 {offsets = [0, 0, 0], sizes = [1, 8, 256], strides = [1, 1, 1]} : vector<8x8x256xf32> to vector<1x8x256xf32>
    %426 = vector.shape_cast %425 : vector<1x8x256xf32> to vector<8x256xf32>
    %427 = arith.addf %424, %426 : vector<8x256xf32>
    %428 = arith.addf %427, %422 : vector<8x256xf32>
    %429 = vector.extract_strided_slice %428 {offsets = [0, 0], sizes = [8, 192], strides = [1, 1]} : vector<8x256xf32> to vector<8x192xf32>
    %430 = arith.negf %429 : vector<8x192xf32>
    %431 = math.exp %430 : vector<8x192xf32>
    %cst_91 = arith.constant 1.000000e+00 : f32
    %432 = vector.broadcast %cst_91 : f32 to vector<8x192xf32>
    %433 = arith.addf %432, %431 : vector<8x192xf32>
    %434 = arith.divf %432, %433 : vector<8x192xf32>
    %435 = vector.extract_strided_slice %428 {offsets = [0, 192], sizes = [8, 64], strides = [1, 1]} : vector<8x256xf32> to vector<8x64xf32>
    %436 = math.tanh %435 : vector<8x64xf32>
    %437 = vector.extract_strided_slice %434 {offsets = [0, 64], sizes = [8, 64], strides = [1, 1]} : vector<8x192xf32> to vector<8x64xf32>
    %438 = arith.mulf %437, %417 : vector<8x64xf32>
    %439 = vector.extract_strided_slice %434 {offsets = [0, 0], sizes = [8, 64], strides = [1, 1]} : vector<8x192xf32> to vector<8x64xf32>
    %440 = arith.mulf %439, %436 : vector<8x64xf32>
    %441 = arith.addf %438, %440 : vector<8x64xf32>
    %442 = vector.extract_strided_slice %434 {offsets = [0, 128], sizes = [8, 64], strides = [1, 1]} : vector<8x192xf32> to vector<8x64xf32>
    %443 = math.tanh %441 : vector<8x64xf32>
    %444 = arith.mulf %442, %443 : vector<8x64xf32>
    %445 = vector.extract_strided_slice %444 {offsets = [0, 0], sizes = [8, 32], strides = [1, 1]} : vector<8x64xf32> to vector<8x32xf32>
    %446 = vector.extract_strided_slice %276 {offsets = [0, 32], sizes = [8, 32], strides = [1, 1]} : vector<8x64xf32> to vector<8x32xf32>
    %447 = tpu.concatenate %445, %446 in 1 : vector<8x32xf32>, vector<8x32xf32> -> vector<8x64xf32>
    %c0_92 = arith.constant 0 : index
    %c0_93 = arith.constant 0 : index
    %448 = vector.load %arg9[%c0_92, %c0_93] : memref<64x32xf32, #tpu.memory_space<vmem>>, vector<64x32xf32>
    %cst_94 = arith.constant dense<0.000000e+00> : vector<8x32xf32>
    %449 = tpu.matmul %447, %448, %cst_94 {dimension_numbers = #tpu.dot_dimension_numbers<[1], [0], [0], [1], [0, 0, 1, 1], [], []>} : vector<8x64xf32>, vector<64x32xf32>, vector<8x32xf32> -> vector<8x32xf32>
    %c0_95 = arith.constant 0 : index
    %c0_96 = arith.constant 0 : index
    %450 = vector.load %arg10[%c0_95, %c0_96] : memref<8x32xf32, #tpu.memory_space<vmem>>, vector<8x32xf32>
    tpu.vector_store %arg10[%c0_95, %c0_96], %449 {strides = array<i32>} : memref<8x32xf32, #tpu.memory_space<vmem>>, vector<8x32xf32>,
    %451 = tpu.concatenate %230, %444, %227, %441 in 1 : vector<8x64xf32>, vector<8x64xf32>, vector<8x64xf32>, vector<8x64xf32> -> vector<8x256xf32>
    %c0_97 = arith.constant 0 : index
    %c0_98 = arith.constant 0 : index
    %452 = vector.load %arg11[%c0_97, %c0_98] : memref<8x256xf32, #tpu.memory_space<vmem>>, vector<8x256xf32>
    tpu.vector_store %arg11[%c0_97, %c0_98], %451 {strides = array<i32>} : memref<8x256xf32, #tpu.memory_space<vmem>>, vector<8x256xf32>,
    return
  }
}

</mosaic_0001>

<llo_original>
// kernel: lstm_model_forward_pallas.1
$region0: #{lstm_model_forward_pallas.1}
  #allocation0 [shape = 'u32[]', space=smem, size = 0x4, offset = 0x4, fixed_abs, tag = 'smem constant byte address 0x4 - core index']
  #allocation1 [shape = 'u32[144,128]{1,0:T(1,128)}', space=vmem, size = 0x12000, scoped, tag = 'internal scratch']
  #allocation2 [shape = 'f32[8,8,64]{2,1,0:T(8,128)}', space=vmem, size = 0x8000, scoped, tag = 'scratch operand']
  %s0 = inlined_call_operand.vmem [shape: f32[64,8], index: 0, kind: input, shape index: {}]
  %s1 = inlined_call_operand.vmem [shape: f32[4,8,32], index: 1, kind: input, shape index: {}]
  %s2 = inlined_call_operand.vmem [shape: f32[4,8,32], index: 2, kind: input, shape index: {}]
  %s3 = inlined_call_operand.vmem [shape: f32[8,256], index: 3, kind: input, shape index: {}]
  %s4 = inlined_call_operand.hbm [shape: f32[8,256], index: 4, kind: input, shape index: {}]
  %s5 = inlined_call_operand.hbm [shape: bf16[64,256], index: 5, kind: input, shape index: {}]
  %s6 = inlined_call_operand.vmem [shape: f32[64,256], index: 6, kind: input, shape index: {}]
  %s7 = inlined_call_operand.vmem [shape: f32[64,256], index: 7, kind: input, shape index: {}]
  %s8 = inlined_call_operand.hbm [shape: bf16[64,256], index: 8, kind: input, shape index: {}]
  %s9 = inlined_call_operand.vmem [shape: f32[64,32], index: 9, kind: input, shape index: {}]
  %s10 = inlined_call_operand.vmem [shape: f32[8,32], index: 10, kind: output, shape index: {0}]
  %s11 = inlined_call_operand.vmem [shape: f32[8,256], index: 11, kind: output, shape index: {1}]
  %12 = xla_tuple %s10, %s11
  %s13 = sld [smem:[#allocation0]]
  $region70: #{lstm_model_forward_pallas.1} parent=0
    _
  %s15 = ssub.s32 1, %s13
  %s16 = scalar_select 0, %s15, %s13
  $region1: #{lstm_model_forward_pallas.1} parent=0
    #allocation3 [shape = 'u8[8192]{0}', space=vmem, size = 0x2000, scoped, tag = 'input window, operand 4, single buffered']
    #allocation4 [shape = 's32[1]{0}', space=sflag, size = 0x4, scoped, tag = 'scoped memory for lstm_model_forward_pallas.1']
    #allocation5 [shape = 'u8[32768]{0}', space=vmem, size = 0x8000, scoped, tag = 'input window, operand 5, single buffered']
    #allocation6 [shape = 's32[1]{0}', space=sflag, size = 0x4, scoped, tag = 'scoped memory for lstm_model_forward_pallas.1']
    #allocation7 [shape = 'u8[32768]{0}', space=vmem, size = 0x8000, scoped, tag = 'input window, operand 8, single buffered']
    %17 = vsyncpa [#allocation4], 0
    %18 = vsyncpa [#allocation6], 0
    // Predicated region
    $region2: #{lstm_model_forward_pallas.1} parent=1 // pred_check
      _
    $region3: #{lstm_model_forward_pallas.1} parent=1 // pred_check_branch
      %20 = sbr.rel (0) target = $region5
    $region4: #{lstm_model_forward_pallas.1} parent=1 // pred_region
      _
    $region5: #{lstm_model_forward_pallas.1} parent=1 // pred_fallthru
      _
    // Predicated region
    $region6: #{lstm_model_forward_pallas.1} parent=1 // pred_check
      _
    $region7: #{lstm_model_forward_pallas.1} parent=1 // pred_check_branch
      %22 = sbr.rel (0) target = $region9
    $region8: #{lstm_model_forward_pallas.1} parent=1 // pred_region
      _
    $region9: #{lstm_model_forward_pallas.1} parent=1 // pred_fallthru
      _
    // Predicated region
    $region10: #{lstm_model_forward_pallas.1} parent=1 // pred_check
      _
    $region11: #{lstm_model_forward_pallas.1} parent=1 // pred_check_branch
      %24 = sbr.rel (0) target = $region13
    $region12: #{lstm_model_forward_pallas.1} parent=1 // pred_region
      _
    $region13: #{lstm_model_forward_pallas.1} parent=1 // pred_fallthru
      _
    // Predicated region
    $region14: #{lstm_model_forward_pallas.1} parent=1 // pred_check
      _
    $region15: #{lstm_model_forward_pallas.1} parent=1 // pred_check_branch
      %26 = sbr.rel (0) target = $region17
    $region16: #{lstm_model_forward_pallas.1} parent=1 // pred_region
      _
    $region17: #{lstm_model_forward_pallas.1} parent=1 // pred_fallthru
      _
    // Predicated region
    $region18: #{lstm_model_forward_pallas.1} parent=1 // pred_check
      _
    $region19: #{lstm_model_forward_pallas.1} parent=1 // pred_check_branch
      %28 = sbr.rel (0) target = $region21
    $region20: #{lstm_model_forward_pallas.1} parent=1 // pred_region
      %s30 = ssub.s32 256, 256
      %31 = vsyncadd [#allocation4], %s30
      %s33 = sshll.u32 [#allocation3], 4
      %s34 = int_to_ptr.vmem [resolvable:$true] %s33
      %36 = dma.hbm_to_vmem [thread:$0]  %s4, 256, %s34, [#allocation4]
    $region21: #{lstm_model_forward_pallas.1} parent=1 // pred_fallthru
      _
    // Predicated region
    $region22: #{lstm_model_forward_pallas.1} parent=1 // pred_check
      _
    $region23: #{lstm_model_forward_pallas.1} parent=1 // pred_check_branch
      %38 = sbr.rel (0) target = $region25
    $region24: #{lstm_model_forward_pallas.1} parent=1 // pred_region
      %s40 = ssub.s32 1024, 1024
      %41 = vsyncadd [#allocation6], %s40
      %s42 = sshll.u32 [#allocation5], 4
      %s43 = int_to_ptr.vmem [resolvable:$true] %s42
      %48 = dma.hbm_to_vmem [thread:$0]  %s5, 1024, %s43, [#allocation6], 128, 128, 8
    $region25: #{lstm_model_forward_pallas.1} parent=1 // pred_fallthru
      _
    // Predicated region
    $region26: #{lstm_model_forward_pallas.1} parent=1 // pred_check
      _
    $region27: #{lstm_model_forward_pallas.1} parent=1 // pred_check_branch
      %50 = sbr.rel (0) target = $region29
    $region28: #{lstm_model_forward_pallas.1} parent=1 // pred_region
      _
    $region29: #{lstm_model_forward_pallas.1} parent=1 // pred_fallthru
      _
    // Predicated region
    $region30: #{lstm_model_forward_pallas.1} parent=1 // pred_check
      _
    $region31: #{lstm_model_forward_pallas.1} parent=1 // pred_check_branch
      %52 = sbr.rel (0) target = $region33
    $region32: #{lstm_model_forward_pallas.1} parent=1 // pred_region
      _
    $region33: #{lstm_model_forward_pallas.1} parent=1 // pred_fallthru
      _
    // Predicated region
    $region34: #{lstm_model_forward_pallas.1} parent=1 // pred_check
      _
    $region35: #{lstm_model_forward_pallas.1} parent=1 // pred_check_branch
      %54 = sbr.rel (0) target = $region37
    $region36: #{lstm_model_forward_pallas.1} parent=1 // pred_region
      %s56 = ssub.s32 1024, 1024
      %57 = vsyncadd [#allocation6], %s56
      %s58 = sshll.u32 [#allocation7], 4
      %s59 = int_to_ptr.vmem [resolvable:$true] %s58
      %64 = dma.hbm_to_vmem [thread:$0]  %s8, 1024, %s59, [#allocation6], 128, 128, 8
    $region37: #{lstm_model_forward_pallas.1} parent=1 // pred_fallthru
      _
    // Predicated region
    $region38: #{lstm_model_forward_pallas.1} parent=1 // pred_check
      _
    $region39: #{lstm_model_forward_pallas.1} parent=1 // pred_check_branch
      %66 = sbr.rel (0) target = $region41
    $region40: #{lstm_model_forward_pallas.1} parent=1 // pred_region
      _
    $region41: #{lstm_model_forward_pallas.1} parent=1 // pred_fallthru
      _
    // Predicated region
    $region42: #{lstm_model_forward_pallas.1} parent=1 // pred_check
      _
    $region43: #{lstm_model_forward_pallas.1} parent=1 // pred_check_branch
      %68 = sbr.rel (0) target = $region45
    $region44: #{lstm_model_forward_pallas.1} parent=1 // pred_region
      %69 = dma.done [#allocation4], 256
    $region45: #{lstm_model_forward_pallas.1} parent=1 // pred_fallthru
      _
    // Predicated region
    $region46: #{lstm_model_forward_pallas.1} parent=1 // pred_check
      _
    $region47: #{lstm_model_forward_pallas.1} parent=1 // pred_check_branch
      %71 = sbr.rel (0) target = $region49
    $region48: #{lstm_model_forward_pallas.1} parent=1 // pred_region
      %72 = dma.done [#allocation6], 1024
    $region49: #{lstm_model_forward_pallas.1} parent=1 // pred_fallthru
      _
    // Predicated region
    $region50: #{lstm_model_forward_pallas.1} parent=1 // pred_check
      _
    $region51: #{lstm_model_forward_pallas.1} parent=1 // pred_check_branch
      %74 = sbr.rel (0) target = $region53
    $region52: #{lstm_model_forward_pallas.1} parent=1 // pred_region
      %75 = dma.done [#allocation6], 1024
    $region53: #{lstm_model_forward_pallas.1} parent=1 // pred_fallthru
      _
    %v77 = vld [vmem:[%s0] sm:$0xff]
    %v78 = vld [vmem:[%s0 + $0x8] sm:$0xff]
    %v79 = vld [vmem:[%s0 + $0x10] sm:$0xff]
    %v80 = vld [vmem:[%s0 + $0x18] sm:$0xff]
    %v81 = vld [vmem:[%s0 + $0x20] sm:$0xff]
    %v82 = vld [vmem:[%s0 + $0x28] sm:$0xff]
    %v83 = vld [vmem:[%s0 + $0x30] sm:$0xff]
    %v84 = vld [vmem:[%s0 + $0x38] sm:$0xff]
    %v85 = vld [vmem:[%s3] sm:$0xff]
    %v86 = vld [vmem:[%s3 + $0x8] sm:$0xff]
    %vm87 = vcmask 64512
    %v89 = vsel %vm87, %v77, 0
    %v92 = vsel %vm87, %v78, 0
    %v95 = vsel %vm87, %v79, 0
    %v98 = vsel %vm87, %v80, 0
    %v101 = vsel %vm87, %v81, 0
    %v104 = vsel %vm87, %v82, 0
    %v107 = vsel %vm87, %v83, 0
    %v110 = vsel %vm87, %v84, 0
    %112 = vmatprep.subr.mxu0 %v86
    %113 = vmatpush1.msra.mxu0 %v85
    %114 = vmatprep.subr.mxu0 0.0
    %115 = vmatpush1.msra.mxu0 0.0
    %116 = vmatprep.subr.mxu0 0.0
    %117 = vmatpush1.msra.mxu0 0.0
    %118 = vmatprep.subr.mxu0 0.0
    %119 = vmatpush1.msra.mxu0 0.0
    %120 = vmatprep.subr.mxu0 0.0
    %121 = vmatpush1.msra.mxu0 0.0
    %122 = vmatprep.subr.mxu0 0.0
    %123 = vmatpush1.msra.mxu0 0.0
    %124 = vmatprep.subr.mxu0 0.0
    %125 = vmatpush1.msra.mxu0 0.0
    %126 = vmatprep.subr.mxu0 0.0
    %127 = vmatpush1.msra.mxu0 0.0
    %128 = vmatprep.subr.mxu0 0.0
    %129 = vmatpush1.msra.mxu0 0.0
    %130 = vmatprep.subr.mxu0 0.0
    %131 = vmatpush1.msra.mxu0 0.0
    %132 = vmatprep.subr.mxu0 0.0
    %133 = vmatpush1.msra.mxu0 0.0
    %134 = vmatprep.subr.mxu0 0.0
    %135 = vmatpush1.msra.mxu0 0.0
    %136 = vmatprep.subr.mxu0 0.0
    %137 = vmatpush1.msra.mxu0 0.0
    %138 = vmatprep.subr.mxu0 0.0
    %139 = vmatpush1.msra.mxu0 0.0
    %140 = vmatprep.subr.mxu0 0.0
    %141 = vmatpush1.msra.mxu0 0.0
    %142 = vmatprep.subr.mxu0 0.0
    %143 = vmatpush1.msra.mxu0 0.0
    %144 = vmatprep.subr.mxu0 0.0
    %145 = vmatpush1.msra.mxu0 0.0
    %146 = vmatprep.subr.mxu0 0.0
    %147 = vmatpush1.msra.mxu0 0.0
    %148 = vmatprep.subr.mxu0 0.0
    %149 = vmatpush1.msra.mxu0 0.0
    %150 = vmatprep.subr.mxu0 0.0
    %151 = vmatpush1.msra.mxu0 0.0
    %152 = vmatprep.subr.mxu0 0.0
    %153 = vmatpush1.msra.mxu0 0.0
    %154 = vmatprep.subr.mxu0 0.0
    %155 = vmatpush1.msra.mxu0 0.0
    %156 = vmatprep.subr.mxu0 0.0
    %157 = vmatpush1.msra.mxu0 0.0
    %158 = vmatprep.subr.mxu0 0.0
    %159 = vmatpush1.msra.mxu0 0.0
    %160 = vmatprep.subr.mxu0 0.0
    %161 = vmatpush1.msra.mxu0 0.0
    %162 = vmatprep.subr.mxu0 0.0
    %163 = vmatpush1.msra.mxu0 0.0
    %164 = vmatprep.subr.mxu0 0.0
    %165 = vmatpush1.msra.mxu0 0.0
    %166 = vmatprep.subr.mxu0 0.0
    %167 = vmatpush1.msra.mxu0 0.0
    %168 = vmatprep.subr.mxu0 0.0
    %169 = vmatpush1.msra.mxu0 0.0
    %170 = vmatprep.subr.mxu0 0.0
    %171 = vmatpush1.msra.mxu0 0.0
    %172 = vmatprep.subr.mxu0 0.0
    %173 = vmatpush1.msra.mxu0 0.0
    %174 = vmatprep.subr.mxu0 0.0
    %175 = vmatpush1.msra.mxu0 0.0
    %176 = vmatprep.mubr.f32.mxu0 0.0
    %177 = vmatmul.mubr.f32.gmra.mrb[0].mxu0 %v89
    %v178 = vpop.f32.mrb[0].mxu0
    %v179 = vadd.f32 0.0, %v178
    %v180 = vpop.f32.mrb[0].mxu0
    %v181 = vadd.f32 0.0, %v180
    %182 = vmatprep.mubr.f32.mxu0 0.0
    %183 = vmatmul.mubr.f32.gmra.mrb[0].mxu0 %v92
    %v184 = vpop.f32.mrb[0].mxu0
    %v185 = vadd.f32 0.0, %v184
    %v186 = vpop.f32.mrb[0].mxu0
    %v187 = vadd.f32 0.0, %v186
    %188 = vmatprep.mubr.f32.mxu0 0.0
    %189 = vmatmul.mubr.f32.gmra.mrb[0].mxu0 %v95
    %v190 = vpop.f32.mrb[0].mxu0
    %v191 = vadd.f32 0.0, %v190
    %v192 = vpop.f32.mrb[0].mxu0
    %v193 = vadd.f32 0.0, %v192
    %194 = vmatprep.mubr.f32.mxu0 0.0
    %195 = vmatmul.mubr.f32.gmra.mrb[0].mxu0 %v98
    %v196 = vpop.f32.mrb[0].mxu0
    %v197 = vadd.f32 0.0, %v196
    %v198 = vpop.f32.mrb[0].mxu0
    %v199 = vadd.f32 0.0, %v198
    %200 = vmatprep.mubr.f32.mxu0 0.0
    %201 = vmatmul.mubr.f32.gmra.mrb[0].mxu0 %v101
    %v202 = vpop.f32.mrb[0].mxu0
    %v203 = vadd.f32 0.0, %v202
    %v204 = vpop.f32.mrb[0].mxu0
    %v205 = vadd.f32 0.0, %v204
    %206 = vmatprep.mubr.f32.mxu0 0.0
    %207 = vmatmul.mubr.f32.gmra.mrb[0].mxu0 %v104
    %v208 = vpop.f32.mrb[0].mxu0
    %v209 = vadd.f32 0.0, %v208
    %v210 = vpop.f32.mrb[0].mxu0
    %v211 = vadd.f32 0.0, %v210
    %212 = vmatprep.mubr.f32.mxu0 0.0
    %213 = vmatmul.mubr.f32.gmra.mrb[0].mxu0 %v107
    %v214 = vpop.f32.mrb[0].mxu0
    %v215 = vadd.f32 0.0, %v214
    %v216 = vpop.f32.mrb[0].mxu0
    %v217 = vadd.f32 0.0, %v216
    %218 = vmatprep.mubr.f32.mxu0 0.0
    %219 = vmatmul.mubr.f32.gmra.mrb[0].mxu0 %v110
    %v220 = vpop.f32.mrb[0].mxu0
    %v221 = vadd.f32 0.0, %v220
    %v222 = vpop.f32.mrb[0].mxu0
    %v223 = vadd.f32 0.0, %v222
    %224 = vdwg.mxu0
    %v225 = vld [vmem:[#allocation3] sm:$0xff]
    %v226 = vld [vmem:[#allocation3 + $0x8] sm:$0xff]
    %227 = vmatprep.subr.mxu0 %v226
    %228 = vmatpush1.msra.mxu0 %v225
    %229 = vmatprep.subr.mxu0 0.0
    %230 = vmatpush1.msra.mxu0 0.0
    %231 = vmatprep.subr.mxu0 0.0
    %232 = vmatpush1.msra.mxu0 0.0
    %233 = vmatprep.subr.mxu0 0.0
    %234 = vmatpush1.msra.mxu0 0.0
    %235 = vmatprep.subr.mxu0 0.0
    %236 = vmatpush1.msra.mxu0 0.0
    %237 = vmatprep.subr.mxu0 0.0
    %238 = vmatpush1.msra.mxu0 0.0
    %239 = vmatprep.subr.mxu0 0.0
    %240 = vmatpush1.msra.mxu0 0.0
    %241 = vmatprep.subr.mxu0 0.0
    %242 = vmatpush1.msra.mxu0 0.0
    %243 = vmatprep.subr.mxu0 0.0
    %244 = vmatpush1.msra.mxu0 0.0
    %245 = vmatprep.subr.mxu0 0.0
    %246 = vmatpush1.msra.mxu0 0.0
    %247 = vmatprep.subr.mxu0 0.0
    %248 = vmatpush1.msra.mxu0 0.0
    %249 = vmatprep.subr.mxu0 0.0
    %250 = vmatpush1.msra.mxu0 0.0
    %251 = vmatprep.subr.mxu0 0.0
    %252 = vmatpush1.msra.mxu0 0.0
    %253 = vmatprep.subr.mxu0 0.0
    %254 = vmatpush1.msra.mxu0 0.0
    %255 = vmatprep.subr.mxu0 0.0
    %256 = vmatpush1.msra.mxu0 0.0
    %257 = vmatprep.subr.mxu0 0.0
    %258 = vmatpush1.msra.mxu0 0.0
    %259 = vmatprep.subr.mxu0 0.0
    %260 = vmatpush1.msra.mxu0 0.0
    %261 = vmatprep.subr.mxu0 0.0
    %262 = vmatpush1.msra.mxu0 0.0
    %263 = vmatprep.subr.mxu0 0.0
    %264 = vmatpush1.msra.mxu0 0.0
    %265 = vmatprep.subr.mxu0 0.0
    %266 = vmatpush1.msra.mxu0 0.0
    %267 = vmatprep.subr.mxu0 0.0
    %268 = vmatpush1.msra.mxu0 0.0
    %269 = vmatprep.subr.mxu0 0.0
    %270 = vmatpush1.msra.mxu0 0.0
    %271 = vmatprep.subr.mxu0 0.0
    %272 = vmatpush1.msra.mxu0 0.0
    %273 = vmatprep.subr.mxu0 0.0
    %274 = vmatpush1.msra.mxu0 0.0
    %275 = vmatprep.subr.mxu0 0.0
    %276 = vmatpush1.msra.mxu0 0.0
    %277 = vmatprep.subr.mxu0 0.0
    %278 = vmatpush1.msra.mxu0 0.0
    %279 = vmatprep.subr.mxu0 0.0
    %280 = vmatpush1.msra.mxu0 0.0
    %281 = vmatprep.subr.mxu0 0.0
    %282 = vmatpush1.msra.mxu0 0.0
    %283 = vmatprep.subr.mxu0 0.0
    %284 = vmatpush1.msra.mxu0 0.0
    %285 = vmatprep.subr.mxu0 0.0
    %286 = vmatpush1.msra.mxu0 0.0
    %287 = vmatprep.subr.mxu0 0.0
    %288 = vmatpush1.msra.mxu0 0.0
    %289 = vmatprep.subr.mxu0 0.0
    %290 = vmatpush1.msra.mxu0 0.0
    %291 = vmatprep.mubr.f32.mxu0 0.0
    %292 = vmatmul.mubr.f32.gmra.mrb[0].mxu0 %v89
    %v293 = vpop.f32.mrb[0].mxu0
    %v294 = vadd.f32 0.0, %v293
    %v295 = vpop.f32.mrb[0].mxu0
    %v296 = vadd.f32 0.0, %v295
    %297 = vmatprep.mubr.f32.mxu0 0.0
    %298 = vmatmul.mubr.f32.gmra.mrb[0].mxu0 %v92
    %v299 = vpop.f32.mrb[0].mxu0
    %v300 = vadd.f32 0.0, %v299
    %v301 = vpop.f32.mrb[0].mxu0
    %v302 = vadd.f32 0.0, %v301
    %303 = vmatprep.mubr.f32.mxu0 0.0
    %304 = vmatmul.mubr.f32.gmra.mrb[0].mxu0 %v95
    %v305 = vpop.f32.mrb[0].mxu0
    %v306 = vadd.f32 0.0, %v305
    %v307 = vpop.f32.mrb[0].mxu0
    %v308 = vadd.f32 0.0, %v307
    %309 = vmatprep.mubr.f32.mxu0 0.0
    %310 = vmatmul.mubr.f32.gmra.mrb[0].mxu0 %v98
    %v311 = vpop.f32.mrb[0].mxu0
    %v312 = vadd.f32 0.0, %v311
    %v313 = vpop.f32.mrb[0].mxu0
    %v314 = vadd.f32 0.0, %v313
    %315 = vmatprep.mubr.f32.mxu0 0.0
    %316 = vmatmul.mubr.f32.gmra.mrb[0].mxu0 %v101
    %v317 = vpop.f32.mrb[0].mxu0
    %v318 = vadd.f32 0.0, %v317
    %v319 = vpop.f32.mrb[0].mxu0
    %v320 = vadd.f32 0.0, %v319
    %321 = vmatprep.mubr.f32.mxu0 0.0
    %322 = vmatmul.mubr.f32.gmra.mrb[0].mxu0 %v104
    %v323 = vpop.f32.mrb[0].mxu0
    %v324 = vadd.f32 0.0, %v323
    %v325 = vpop.f32.mrb[0].mxu0
    %v326 = vadd.f32 0.0, %v325
    %327 = vmatprep.mubr.f32.mxu0 0.0
    %328 = vmatmul.mubr.f32.gmra.mrb[0].mxu0 %v107
    %v329 = vpop.f32.mrb[0].mxu0
    %v330 = vadd.f32 0.0, %v329
    %v331 = vpop.f32.mrb[0].mxu0
    %v332 = vadd.f32 0.0, %v331
    %333 = vmatprep.mubr.f32.mxu0 0.0
    %334 = vmatmul.mubr.f32.gmra.mrb[0].mxu0 %v110
    %v335 = vpop.f32.mrb[0].mxu0
    %v336 = vadd.f32 0.0, %v335
    %v337 = vpop.f32.mrb[0].mxu0
    %v338 = vadd.f32 0.0, %v337
    %339 = vdwg.mxu0
    %v340 = vld [vmem:[%s1] sm:$0xff]
    %s341 = scalar_lea.vmem %s1, 8
    %v342 = vld [vmem:[%s341] sm:$0xff]
    %344 = vrot.lane.b32.xlu0 %v342, 32
    %v345 = vpop.permute.xlu0 %344
    %vm347 = vcmask 261120
    %v348 = vsel %vm347, %v340, %v345
    %v349 = vld [vmem:[%s2] sm:$0xff]
    %s350 = scalar_lea.vmem %s2, 8
    %v351 = vld [vmem:[%s350] sm:$0xff]
    %353 = vrot.lane.b32.xlu0 %v351, 32
    %v354 = vpop.permute.xlu0 %353
    %v356 = vsel %vm347, %v349, %v354
    %v357 = vld [vmem:[#allocation5] sm:$0xff]
    %v358 = vld [vmem:[#allocation5 + $0x8] sm:$0xff]
    %v359 = vld [vmem:[#allocation5 + $0x10] sm:$0xff]
    %v360 = vld [vmem:[#allocation5 + $0x18] sm:$0xff]
    %v361 = vld [vmem:[#allocation5 + $0x20] sm:$0xff]
    %v362 = vld [vmem:[#allocation5 + $0x28] sm:$0xff]
    %v363 = vld [vmem:[#allocation5 + $0x30] sm:$0xff]
    %v364 = vld [vmem:[#allocation5 + $0x38] sm:$0xff]
    %v365 = vpack.c.bf16 %v348, %v348
    %v374 = vunpack.c.l.b16 %v357
    %v375 = vunpack.c.h.b16 %v357
    %v376 = vunpack.c.l.b16 %v358
    %v377 = vunpack.c.h.b16 %v358
    %v378 = vunpack.c.l.b16 %v359
    %v379 = vunpack.c.h.b16 %v359
    %v380 = vunpack.c.l.b16 %v360
    %v381 = vunpack.c.h.b16 %v360
    %v382 = vunpack.c.l.b16 %v361
    %v383 = vunpack.c.h.b16 %v361
    %v384 = vunpack.c.l.b16 %v362
    %v385 = vunpack.c.h.b16 %v362
    %v386 = vunpack.c.l.b16 %v363
    %v387 = vunpack.c.h.b16 %v363
    %v388 = vunpack.c.l.b16 %v364
    %v389 = vunpack.c.h.b16 %v364
    %v390 = vpack.c.b16 %v376, %v374
    %v391 = vpack.c.b16 %v377, %v375
    %v392 = vpack.c.b16 %v380, %v378
    %v393 = vpack.c.b16 %v381, %v379
    %v394 = vpack.c.b16 %v384, %v382
    %v395 = vpack.c.b16 %v385, %v383
    %v396 = vpack.c.b16 %v388, %v386
    %v397 = vpack.c.b16 %v389, %v387
    %vm406 = vcmask 523264
    %v408 = vsel %vm406, %v365, 0
    %410 = vmatprep.subr.bf16.mxu0 %v391
    %411 = vmatpush1.bf16.msra.mxu0 %v390
    %412 = vmatprep.subr.bf16.mxu0 %v393
    %413 = vmatpush1.bf16.msra.mxu0 %v392
    %414 = vmatprep.subr.bf16.mxu0 %v395
    %415 = vmatpush1.bf16.msra.mxu0 %v394
    %416 = vmatprep.subr.bf16.mxu0 %v397
    %417 = vmatpush1.bf16.msra.mxu0 %v396
    %418 = vmatprep.subr.bf16.mxu0 0
    %419 = vmatpush1.bf16.msra.mxu0 0
    %420 = vmatprep.subr.bf16.mxu0 0
    %421 = vmatpush1.bf16.msra.mxu0 0
    %422 = vmatprep.subr.bf16.mxu0 0
    %423 = vmatpush1.bf16.msra.mxu0 0
    %424 = vmatprep.subr.bf16.mxu0 0
    %425 = vmatpush1.bf16.msra.mxu0 0
    %426 = vmatprep.subr.bf16.mxu0 0
    %427 = vmatpush1.bf16.msra.mxu0 0
    %428 = vmatprep.subr.bf16.mxu0 0
    %429 = vmatpush1.bf16.msra.mxu0 0
    %430 = vmatprep.subr.bf16.mxu0 0
    %431 = vmatpush1.bf16.msra.mxu0 0
    %432 = vmatprep.subr.bf16.mxu0 0
    %433 = vmatpush1.bf16.msra.mxu0 0
    %434 = vmatprep.subr.bf16.mxu0 0
    %435 = vmatpush1.bf16.msra.mxu0 0
    %436 = vmatprep.subr.bf16.mxu0 0
    %437 = vmatpush1.bf16.msra.mxu0 0
    %438 = vmatprep.subr.bf16.mxu0 0
    %439 = vmatpush1.bf16.msra.mxu0 0
    %440 = vmatprep.subr.bf16.mxu0 0
    %441 = vmatpush1.bf16.msra.mxu0 0
    %442 = vmatprep.mubr.bf16.mxu0 0
    %443 = vmatmul.mubr.bf16.gmra.mrb[0].mxu0 %v408
    %v444 = vpop.f32.mrb[0].mxu0
    %v445 = vadd.f32 0.0, %v444
    %v446 = vpop.f32.mrb[0].mxu0
    %v447 = vadd.f32 0.0, %v446
    %v448 = vpop.f32.mrb[0].mxu0
    %v449 = vpop.f32.mrb[0].mxu0
    %450 = vdwg.mxu0
    %v451 = vadd.f32 %v179, %v336
    %v452 = vadd.f32 %v181, %v338
    %v453 = vadd.f32 %v451, %v445
    %v454 = vadd.f32 %v452, %v447
    %v455 = vxor.u32 %v453, 2147483648
    %v456 = vxor.u32 %v454, 2147483648
    %v457 = vmul.f32 %v455, 1.442695
    %v458 = vpow.pop %v457
    %v459 = vmul.f32 %v456, 1.442695
    %v460 = vpow.pop %v459
    %v461 = vadd.f32 %v458, 1.0
    %v462 = vadd.f32 %v460, 1.0
    %v463 = vrcp.pop %v461
    %v464 = vmul.f32 1.0, %v463
    %v465 = vrcp.pop %v462
    %v466 = vmul.f32 1.0, %v465
    %v467 = vtanh.pop %v454
    %469 = vrot.lane.b32.xlu0 %v356, 64
    %v470 = vpop.permute.xlu0 %469
    %v472 = vmul.f32 %v464, %v470
    %474 = vrot.lane.b32.xlu0 %v467, 64
    %v475 = vpop.permute.xlu0 %474
    %v477 = vmul.f32 %v464, %v475
    %479 = vrot.lane.b32.xlu0 %v477, 64
    %v480 = vpop.permute.xlu0 %479
    %v482 = vadd.f32 %v472, %v480
    %v483 = vtanh.pop %v482
    %485 = vrot.lane.b32.xlu0 %v483, 64
    %v486 = vpop.permute.xlu0 %485
    %v488 = vmul.f32 %v466, %v486
    %489 = vst.msk [vmem:[#allocation2] sm:$0xff] %vm406, %v488
    %v490 = vpack.c.bf16 %v488, %v488
    %v492 = vsel %vm406, %v490, 0
    %494 = vmatprep.subr.bf16.mxu0 %v391
    %495 = vmatpush1.bf16.msra.mxu0 %v390
    %496 = vmatprep.subr.bf16.mxu0 %v393
    %497 = vmatpush1.bf16.msra.mxu0 %v392
    %498 = vmatprep.subr.bf16.mxu0 %v395
    %499 = vmatpush1.bf16.msra.mxu0 %v394
    %500 = vmatprep.subr.bf16.mxu0 %v397
    %501 = vmatpush1.bf16.msra.mxu0 %v396
    %502 = vmatprep.subr.bf16.mxu0 0
    %503 = vmatpush1.bf16.msra.mxu0 0
    %504 = vmatprep.subr.bf16.mxu0 0
    %505 = vmatpush1.bf16.msra.mxu0 0
    %506 = vmatprep.subr.bf16.mxu0 0
    %507 = vmatpush1.bf16.msra.mxu0 0
    %508 = vmatprep.subr.bf16.mxu0 0
    %509 = vmatpush1.bf16.msra.mxu0 0
    %510 = vmatprep.subr.bf16.mxu0 0
    %511 = vmatpush1.bf16.msra.mxu0 0
    %512 = vmatprep.subr.bf16.mxu0 0
    %513 = vmatpush1.bf16.msra.mxu0 0
    %514 = vmatprep.subr.bf16.mxu0 0
    %515 = vmatpush1.bf16.msra.mxu0 0
    %516 = vmatprep.subr.bf16.mxu0 0
    %517 = vmatpush1.bf16.msra.mxu0 0
    %518 = vmatprep.subr.bf16.mxu0 0
    %519 = vmatpush1.bf16.msra.mxu0 0
    %520 = vmatprep.subr.bf16.mxu0 0
    %521 = vmatpush1.bf16.msra.mxu0 0
    %522 = vmatprep.subr.bf16.mxu0 0
    %523 = vmatpush1.bf16.msra.mxu0 0
    %524 = vmatprep.subr.bf16.mxu0 0
    %525 = vmatpush1.bf16.msra.mxu0 0
    %526 = vmatprep.mubr.bf16.mxu0 0
    %527 = vmatmul.mubr.bf16.gmra.mrb[0].mxu0 %v492
    %v528 = vpop.f32.mrb[0].mxu0
    %v529 = vadd.f32 0.0, %v528
    %v530 = vpop.f32.mrb[0].mxu0
    %v531 = vadd.f32 0.0, %v530
    %v532 = vpop.f32.mrb[0].mxu0
    %v533 = vpop.f32.mrb[0].mxu0
    %534 = vdwg.mxu0
    %v535 = vadd.f32 %v185, %v330
    %v536 = vadd.f32 %v187, %v332
    %v537 = vadd.f32 %v535, %v529
    %v538 = vadd.f32 %v536, %v531
    %v539 = vxor.u32 %v537, 2147483648
    %v540 = vxor.u32 %v538, 2147483648
    %v541 = vmul.f32 %v539, 1.442695
    %v542 = vpow.pop %v541
    %v543 = vmul.f32 %v540, 1.442695
    %v544 = vpow.pop %v543
    %v545 = vadd.f32 %v542, 1.0
    %v546 = vadd.f32 %v544, 1.0
    %v547 = vrcp.pop %v545
    %v548 = vmul.f32 1.0, %v547
    %v549 = vrcp.pop %v546
    %v550 = vmul.f32 1.0, %v549
    %v551 = vtanh.pop %v538
    %v552 = vmul.f32 %v548, %v482
    %554 = vrot.lane.b32.xlu0 %v551, 64
    %v555 = vpop.permute.xlu0 %554
    %v557 = vmul.f32 %v548, %v555
    %559 = vrot.lane.b32.xlu0 %v557, 64
    %v560 = vpop.permute.xlu0 %559
    %v562 = vadd.f32 %v552, %v560
    %v563 = vtanh.pop %v562
    %565 = vrot.lane.b32.xlu0 %v563, 64
    %v566 = vpop.permute.xlu0 %565
    %v568 = vmul.f32 %v550, %v566
    %s569 = scalar_lea.vmem [#allocation2], 8
    %570 = vst.msk [vmem:[%s569] sm:$0xff] %vm406, %v568
    %v571 = vpack.c.bf16 %v568, %v568
    %v573 = vsel %vm406, %v571, 0
    %575 = vmatprep.subr.bf16.mxu0 %v391
    %576 = vmatpush1.bf16.msra.mxu0 %v390
    %577 = vmatprep.subr.bf16.mxu0 %v393
    %578 = vmatpush1.bf16.msra.mxu0 %v392
    %579 = vmatprep.subr.bf16.mxu0 %v395
    %580 = vmatpush1.bf16.msra.mxu0 %v394
    %581 = vmatprep.subr.bf16.mxu0 %v397
    %582 = vmatpush1.bf16.msra.mxu0 %v396
    %583 = vmatprep.subr.bf16.mxu0 0
    %584 = vmatpush1.bf16.msra.mxu0 0
    %585 = vmatprep.subr.bf16.mxu0 0
    %586 = vmatpush1.bf16.msra.mxu0 0
    %587 = vmatprep.subr.bf16.mxu0 0
    %588 = vmatpush1.bf16.msra.mxu0 0
    %589 = vmatprep.subr.bf16.mxu0 0
    %590 = vmatpush1.bf16.msra.mxu0 0
    %591 = vmatprep.subr.bf16.mxu0 0
    %592 = vmatpush1.bf16.msra.mxu0 0
    %593 = vmatprep.subr.bf16.mxu0 0
    %594 = vmatpush1.bf16.msra.mxu0 0
    %595 = vmatprep.subr.bf16.mxu0 0
    %596 = vmatpush1.bf16.msra.mxu0 0
    %597 = vmatprep.subr.bf16.mxu0 0
    %598 = vmatpush1.bf16.msra.mxu0 0
    %599 = vmatprep.subr.bf16.mxu0 0
    %600 = vmatpush1.bf16.msra.mxu0 0
    %601 = vmatprep.subr.bf16.mxu0 0
    %602 = vmatpush1.bf16.msra.mxu0 0
    %603 = vmatprep.subr.bf16.mxu0 0
    %604 = vmatpush1.bf16.msra.mxu0 0
    %605 = vmatprep.subr.bf16.mxu0 0
    %606 = vmatpush1.bf16.msra.mxu0 0
    %607 = vmatprep.mubr.bf16.mxu0 0
    %608 = vmatmul.mubr.bf16.gmra.mrb[0].mxu0 %v573
    %v609 = vpop.f32.mrb[0].mxu0
    %v610 = vadd.f32 0.0, %v609
    %v611 = vpop.f32.mrb[0].mxu0
    %v612 = vadd.f32 0.0, %v611
    %v613 = vpop.f32.mrb[0].mxu0
    %v614 = vpop.f32.mrb[0].mxu0
    %615 = vdwg.mxu0
    %v616 = vadd.f32 %v191, %v324
    %v617 = vadd.f32 %v193, %v326
    %v618 = vadd.f32 %v616, %v610
    %v619 = vadd.f32 %v617, %v612
    %v620 = vxor.u32 %v618, 2147483648
    %v621 = vxor.u32 %v619, 2147483648
    %v622 = vmul.f32 %v620, 1.442695
    %v623 = vpow.pop %v622
    %v624 = vmul.f32 %v621, 1.442695
    %v625 = vpow.pop %v624
    %v626 = vadd.f32 %v623, 1.0
    %v627 = vadd.f32 %v625, 1.0
    %v628 = vrcp.pop %v626
    %v629 = vmul.f32 1.0, %v628
    %v630 = vrcp.pop %v627
    %v631 = vmul.f32 1.0, %v630
    %v632 = vtanh.pop %v619
    %v633 = vmul.f32 %v629, %v562
    %635 = vrot.lane.b32.xlu0 %v632, 64
    %v636 = vpop.permute.xlu0 %635
    %v638 = vmul.f32 %v629, %v636
    %640 = vrot.lane.b32.xlu0 %v638, 64
    %v641 = vpop.permute.xlu0 %640
    %v643 = vadd.f32 %v633, %v641
    %v644 = vtanh.pop %v643
    %646 = vrot.lane.b32.xlu0 %v644, 64
    %v647 = vpop.permute.xlu0 %646
    %v649 = vmul.f32 %v631, %v647
    %s650 = scalar_lea.vmem [#allocation2], 16
    %651 = vst.msk [vmem:[%s650] sm:$0xff] %vm406, %v649
    %v652 = vpack.c.bf16 %v649, %v649
    %v654 = vsel %vm406, %v652, 0
    %656 = vmatprep.subr.bf16.mxu0 %v391
    %657 = vmatpush1.bf16.msra.mxu0 %v390
    %658 = vmatprep.subr.bf16.mxu0 %v393
    %659 = vmatpush1.bf16.msra.mxu0 %v392
    %660 = vmatprep.subr.bf16.mxu0 %v395
    %661 = vmatpush1.bf16.msra.mxu0 %v394
    %662 = vmatprep.subr.bf16.mxu0 %v397
    %663 = vmatpush1.bf16.msra.mxu0 %v396
    %664 = vmatprep.subr.bf16.mxu0 0
    %665 = vmatpush1.bf16.msra.mxu0 0
    %666 = vmatprep.subr.bf16.mxu0 0
    %667 = vmatpush1.bf16.msra.mxu0 0
    %668 = vmatprep.subr.bf16.mxu0 0
    %669 = vmatpush1.bf16.msra.mxu0 0
    %670 = vmatprep.subr.bf16.mxu0 0
    %671 = vmatpush1.bf16.msra.mxu0 0
    %672 = vmatprep.subr.bf16.mxu0 0
    %673 = vmatpush1.bf16.msra.mxu0 0
    %674 = vmatprep.subr.bf16.mxu0 0
    %675 = vmatpush1.bf16.msra.mxu0 0
    %676 = vmatprep.subr.bf16.mxu0 0
    %677 = vmatpush1.bf16.msra.mxu0 0
    %678 = vmatprep.subr.bf16.mxu0 0
    %679 = vmatpush1.bf16.msra.mxu0 0
    %680 = vmatprep.subr.bf16.mxu0 0
    %681 = vmatpush1.bf16.msra.mxu0 0
    %682 = vmatprep.subr.bf16.mxu0 0
    %683 = vmatpush1.bf16.msra.mxu0 0
    %684 = vmatprep.subr.bf16.mxu0 0
    %685 = vmatpush1.bf16.msra.mxu0 0
    %686 = vmatprep.subr.bf16.mxu0 0
    %687 = vmatpush1.bf16.msra.mxu0 0
    %688 = vmatprep.mubr.bf16.mxu0 0
    %689 = vmatmul.mubr.bf16.gmra.mrb[0].mxu0 %v654
    %v690 = vpop.f32.mrb[0].mxu0
    %v691 = vadd.f32 0.0, %v690
    %v692 = vpop.f32.mrb[0].mxu0
    %v693 = vadd.f32 0.0, %v692
    %v694 = vpop.f32.mrb[0].mxu0
    %v695 = vpop.f32.mrb[0].mxu0
    %696 = vdwg.mxu0
    %v697 = vadd.f32 %v197, %v318
    %v698 = vadd.f32 %v199, %v320
    %v699 = vadd.f32 %v697, %v691
    %v700 = vadd.f32 %v698, %v693
    %v701 = vxor.u32 %v699, 2147483648
    %v702 = vxor.u32 %v700, 2147483648
    %v703 = vmul.f32 %v701, 1.442695
    %v704 = vpow.pop %v703
    %v705 = vmul.f32 %v702, 1.442695
    %v706 = vpow.pop %v705
    %v707 = vadd.f32 %v704, 1.0
    %v708 = vadd.f32 %v706, 1.0
    %v709 = vrcp.pop %v707
    %v710 = vmul.f32 1.0, %v709
    %v711 = vrcp.pop %v708
    %v712 = vmul.f32 1.0, %v711
    %v713 = vtanh.pop %v700
    %v714 = vmul.f32 %v710, %v643
    %716 = vrot.lane.b32.xlu0 %v713, 64
    %v717 = vpop.permute.xlu0 %716
    %v719 = vmul.f32 %v710, %v717
    %721 = vrot.lane.b32.xlu0 %v719, 64
    %v722 = vpop.permute.xlu0 %721
    %v724 = vadd.f32 %v714, %v722
    %v725 = vtanh.pop %v724
    %727 = vrot.lane.b32.xlu0 %v725, 64
    %v728 = vpop.permute.xlu0 %727
    %v730 = vmul.f32 %v712, %v728
    %s731 = scalar_lea.vmem [#allocation2], 24
    %732 = vst.msk [vmem:[%s731] sm:$0xff] %vm406, %v730
    %v733 = vpack.c.bf16 %v730, %v730
    %v735 = vsel %vm406, %v733, 0
    %737 = vmatprep.subr.bf16.mxu0 %v391
    %738 = vmatpush1.bf16.msra.mxu0 %v390
    %739 = vmatprep.subr.bf16.mxu0 %v393
    %740 = vmatpush1.bf16.msra.mxu0 %v392
    %741 = vmatprep.subr.bf16.mxu0 %v395
    %742 = vmatpush1.bf16.msra.mxu0 %v394
    %743 = vmatprep.subr.bf16.mxu0 %v397
    %744 = vmatpush1.bf16.msra.mxu0 %v396
    %745 = vmatprep.subr.bf16.mxu0 0
    %746 = vmatpush1.bf16.msra.mxu0 0
    %747 = vmatprep.subr.bf16.mxu0 0
    %748 = vmatpush1.bf16.msra.mxu0 0
    %749 = vmatprep.subr.bf16.mxu0 0
    %750 = vmatpush1.bf16.msra.mxu0 0
    %751 = vmatprep.subr.bf16.mxu0 0
    %752 = vmatpush1.bf16.msra.mxu0 0
    %753 = vmatprep.subr.bf16.mxu0 0
    %754 = vmatpush1.bf16.msra.mxu0 0
    %755 = vmatprep.subr.bf16.mxu0 0
    %756 = vmatpush1.bf16.msra.mxu0 0
    %757 = vmatprep.subr.bf16.mxu0 0
    %758 = vmatpush1.bf16.msra.mxu0 0
    %759 = vmatprep.subr.bf16.mxu0 0
    %760 = vmatpush1.bf16.msra.mxu0 0
    %761 = vmatprep.subr.bf16.mxu0 0
    %762 = vmatpush1.bf16.msra.mxu0 0
    %763 = vmatprep.subr.bf16.mxu0 0
    %764 = vmatpush1.bf16.msra.mxu0 0
    %765 = vmatprep.subr.bf16.mxu0 0
    %766 = vmatpush1.bf16.msra.mxu0 0
    %767 = vmatprep.subr.bf16.mxu0 0
    %768 = vmatpush1.bf16.msra.mxu0 0
    %769 = vmatprep.mubr.bf16.mxu0 0
    %770 = vmatmul.mubr.bf16.gmra.mrb[0].mxu0 %v735
    %v771 = vpop.f32.mrb[0].mxu0
    %v772 = vadd.f32 0.0, %v771
    %v773 = vpop.f32.mrb[0].mxu0
    %v774 = vadd.f32 0.0, %v773
    %v775 = vpop.f32.mrb[0].mxu0
    %v776 = vpop.f32.mrb[0].mxu0
    %777 = vdwg.mxu0
    %v778 = vadd.f32 %v203, %v312
    %v779 = vadd.f32 %v205, %v314
    %v780 = vadd.f32 %v778, %v772
    %v781 = vadd.f32 %v779, %v774
    %v782 = vxor.u32 %v780, 2147483648
    %v783 = vxor.u32 %v781, 2147483648
    %v784 = vmul.f32 %v782, 1.442695
    %v785 = vpow.pop %v784
    %v786 = vmul.f32 %v783, 1.442695
    %v787 = vpow.pop %v786
    %v788 = vadd.f32 %v785, 1.0
    %v789 = vadd.f32 %v787, 1.0
    %v790 = vrcp.pop %v788
    %v791 = vmul.f32 1.0, %v790
    %v792 = vrcp.pop %v789
    %v793 = vmul.f32 1.0, %v792
    %v794 = vtanh.pop %v781
    %v795 = vmul.f32 %v791, %v724
    %797 = vrot.lane.b32.xlu0 %v794, 64
    %v798 = vpop.permute.xlu0 %797
    %v800 = vmul.f32 %v791, %v798
    %802 = vrot.lane.b32.xlu0 %v800, 64
    %v803 = vpop.permute.xlu0 %802
    %v805 = vadd.f32 %v795, %v803
    %v806 = vtanh.pop %v805
    %808 = vrot.lane.b32.xlu0 %v806, 64
    %v809 = vpop.permute.xlu0 %808
    %v811 = vmul.f32 %v793, %v809
    %s812 = scalar_lea.vmem [#allocation2], 32
    %813 = vst.msk [vmem:[%s812] sm:$0xff] %vm406, %v811
    %v814 = vpack.c.bf16 %v811, %v811
    %v816 = vsel %vm406, %v814, 0
    %818 = vmatprep.subr.bf16.mxu0 %v391
    %819 = vmatpush1.bf16.msra.mxu0 %v390
    %820 = vmatprep.subr.bf16.mxu0 %v393
    %821 = vmatpush1.bf16.msra.mxu0 %v392
    %822 = vmatprep.subr.bf16.mxu0 %v395
    %823 = vmatpush1.bf16.msra.mxu0 %v394
    %824 = vmatprep.subr.bf16.mxu0 %v397
    %825 = vmatpush1.bf16.msra.mxu0 %v396
    %826 = vmatprep.subr.bf16.mxu0 0
    %827 = vmatpush1.bf16.msra.mxu0 0
    %828 = vmatprep.subr.bf16.mxu0 0
    %829 = vmatpush1.bf16.msra.mxu0 0
    %830 = vmatprep.subr.bf16.mxu0 0
    %831 = vmatpush1.bf16.msra.mxu0 0
    %832 = vmatprep.subr.bf16.mxu0 0
    %833 = vmatpush1.bf16.msra.mxu0 0
    %834 = vmatprep.subr.bf16.mxu0 0
    %835 = vmatpush1.bf16.msra.mxu0 0
    %836 = vmatprep.subr.bf16.mxu0 0
    %837 = vmatpush1.bf16.msra.mxu0 0
    %838 = vmatprep.subr.bf16.mxu0 0
    %839 = vmatpush1.bf16.msra.mxu0 0
    %840 = vmatprep.subr.bf16.mxu0 0
    %841 = vmatpush1.bf16.msra.mxu0 0
    %842 = vmatprep.subr.bf16.mxu0 0
    %843 = vmatpush1.bf16.msra.mxu0 0
    %844 = vmatprep.subr.bf16.mxu0 0
    %845 = vmatpush1.bf16.msra.mxu0 0
    %846 = vmatprep.subr.bf16.mxu0 0
    %847 = vmatpush1.bf16.msra.mxu0 0
    %848 = vmatprep.subr.bf16.mxu0 0
    %849 = vmatpush1.bf16.msra.mxu0 0
    %850 = vmatprep.mubr.bf16.mxu0 0
    %851 = vmatmul.mubr.bf16.gmra.mrb[0].mxu0 %v816
    %v852 = vpop.f32.mrb[0].mxu0
    %v853 = vadd.f32 0.0, %v852
    %v854 = vpop.f32.mrb[0].mxu0
    %v855 = vadd.f32 0.0, %v854
    %v856 = vpop.f32.mrb[0].mxu0
    %v857 = vpop.f32.mrb[0].mxu0
    %858 = vdwg.mxu0
    %v859 = vadd.f32 %v209, %v306
    %v860 = vadd.f32 %v211, %v308
    %v861 = vadd.f32 %v859, %v853
    %v862 = vadd.f32 %v860, %v855
    %v863 = vxor.u32 %v861, 2147483648
    %v864 = vxor.u32 %v862, 2147483648
    %v865 = vmul.f32 %v863, 1.442695
    %v866 = vpow.pop %v865
    %v867 = vmul.f32 %v864, 1.442695
    %v868 = vpow.pop %v867
    %v869 = vadd.f32 %v866, 1.0
    %v870 = vadd.f32 %v868, 1.0
    %v871 = vrcp.pop %v869
    %v872 = vmul.f32 1.0, %v871
    %v873 = vrcp.pop %v870
    %v874 = vmul.f32 1.0, %v873
    %v875 = vtanh.pop %v862
    %v876 = vmul.f32 %v872, %v805
    %878 = vrot.lane.b32.xlu0 %v875, 64
    %v879 = vpop.permute.xlu0 %878
    %v881 = vmul.f32 %v872, %v879
    %883 = vrot.lane.b32.xlu0 %v881, 64
    %v884 = vpop.permute.xlu0 %883
    %v886 = vadd.f32 %v876, %v884
    %v887 = vtanh.pop %v886
    %889 = vrot.lane.b32.xlu0 %v887, 64
    %v890 = vpop.permute.xlu0 %889
    %v892 = vmul.f32 %v874, %v890
    %s893 = scalar_lea.vmem [#allocation2], 40
    %894 = vst.msk [vmem:[%s893] sm:$0xff] %vm406, %v892
    %v895 = vpack.c.bf16 %v892, %v892
    %v897 = vsel %vm406, %v895, 0
    %899 = vmatprep.subr.bf16.mxu0 %v391
    %900 = vmatpush1.bf16.msra.mxu0 %v390
    %901 = vmatprep.subr.bf16.mxu0 %v393
    %902 = vmatpush1.bf16.msra.mxu0 %v392
    %903 = vmatprep.subr.bf16.mxu0 %v395
    %904 = vmatpush1.bf16.msra.mxu0 %v394
    %905 = vmatprep.subr.bf16.mxu0 %v397
    %906 = vmatpush1.bf16.msra.mxu0 %v396
    %907 = vmatprep.subr.bf16.mxu0 0
    %908 = vmatpush1.bf16.msra.mxu0 0
    %909 = vmatprep.subr.bf16.mxu0 0
    %910 = vmatpush1.bf16.msra.mxu0 0
    %911 = vmatprep.subr.bf16.mxu0 0
    %912 = vmatpush1.bf16.msra.mxu0 0
    %913 = vmatprep.subr.bf16.mxu0 0
    %914 = vmatpush1.bf16.msra.mxu0 0
    %915 = vmatprep.subr.bf16.mxu0 0
    %916 = vmatpush1.bf16.msra.mxu0 0
    %917 = vmatprep.subr.bf16.mxu0 0
    %918 = vmatpush1.bf16.msra.mxu0 0
    %919 = vmatprep.subr.bf16.mxu0 0
    %920 = vmatpush1.bf16.msra.mxu0 0
    %921 = vmatprep.subr.bf16.mxu0 0
    %922 = vmatpush1.bf16.msra.mxu0 0
    %923 = vmatprep.subr.bf16.mxu0 0
    %924 = vmatpush1.bf16.msra.mxu0 0
    %925 = vmatprep.subr.bf16.mxu0 0
    %926 = vmatpush1.bf16.msra.mxu0 0
    %927 = vmatprep.subr.bf16.mxu0 0
    %928 = vmatpush1.bf16.msra.mxu0 0
    %929 = vmatprep.subr.bf16.mxu0 0
    %930 = vmatpush1.bf16.msra.mxu0 0
    %931 = vmatprep.mubr.bf16.mxu0 0
    %932 = vmatmul.mubr.bf16.gmra.mrb[0].mxu0 %v897
    %v933 = vpop.f32.mrb[0].mxu0
    %v934 = vadd.f32 0.0, %v933
    %v935 = vpop.f32.mrb[0].mxu0
    %v936 = vadd.f32 0.0, %v935
    %v937 = vpop.f32.mrb[0].mxu0
    %v938 = vpop.f32.mrb[0].mxu0
    %939 = vdwg.mxu0
    %v940 = vadd.f32 %v215, %v300
    %v941 = vadd.f32 %v217, %v302
    %v942 = vadd.f32 %v940, %v934
    %v943 = vadd.f32 %v941, %v936
    %v944 = vxor.u32 %v942, 2147483648
    %v945 = vxor.u32 %v943, 2147483648
    %v946 = vmul.f32 %v944, 1.442695
    %v947 = vpow.pop %v946
    %v948 = vmul.f32 %v945, 1.442695
    %v949 = vpow.pop %v948
    %v950 = vadd.f32 %v947, 1.0
    %v951 = vadd.f32 %v949, 1.0
    %v952 = vrcp.pop %v950
    %v953 = vmul.f32 1.0, %v952
    %v954 = vrcp.pop %v951
    %v955 = vmul.f32 1.0, %v954
    %v956 = vtanh.pop %v943
    %v957 = vmul.f32 %v953, %v886
    %959 = vrot.lane.b32.xlu0 %v956, 64
    %v960 = vpop.permute.xlu0 %959
    %v962 = vmul.f32 %v953, %v960
    %964 = vrot.lane.b32.xlu0 %v962, 64
    %v965 = vpop.permute.xlu0 %964
    %v967 = vadd.f32 %v957, %v965
    %v968 = vtanh.pop %v967
    %970 = vrot.lane.b32.xlu0 %v968, 64
    %v971 = vpop.permute.xlu0 %970
    %v973 = vmul.f32 %v955, %v971
    %s974 = scalar_lea.vmem [#allocation2], 48
    %975 = vst.msk [vmem:[%s974] sm:$0xff] %vm406, %v973
    %v976 = vpack.c.bf16 %v973, %v973
    %v978 = vsel %vm406, %v976, 0
    %980 = vmatprep.subr.bf16.mxu0 %v391
    %981 = vmatpush1.bf16.msra.mxu0 %v390
    %982 = vmatprep.subr.bf16.mxu0 %v393
    %983 = vmatpush1.bf16.msra.mxu0 %v392
    %984 = vmatprep.subr.bf16.mxu0 %v395
    %985 = vmatpush1.bf16.msra.mxu0 %v394
    %986 = vmatprep.subr.bf16.mxu0 %v397
    %987 = vmatpush1.bf16.msra.mxu0 %v396
    %988 = vmatprep.subr.bf16.mxu0 0
    %989 = vmatpush1.bf16.msra.mxu0 0
    %990 = vmatprep.subr.bf16.mxu0 0
    %991 = vmatpush1.bf16.msra.mxu0 0
    %992 = vmatprep.subr.bf16.mxu0 0
    %993 = vmatpush1.bf16.msra.mxu0 0
    %994 = vmatprep.subr.bf16.mxu0 0
    %995 = vmatpush1.bf16.msra.mxu0 0
    %996 = vmatprep.subr.bf16.mxu0 0
    %997 = vmatpush1.bf16.msra.mxu0 0
    %998 = vmatprep.subr.bf16.mxu0 0
    %999 = vmatpush1.bf16.msra.mxu0 0
    %1000 = vmatprep.subr.bf16.mxu0 0
    %1001 = vmatpush1.bf16.msra.mxu0 0
    %1002 = vmatprep.subr.bf16.mxu0 0
    %1003 = vmatpush1.bf16.msra.mxu0 0
    %1004 = vmatprep.subr.bf16.mxu0 0
    %1005 = vmatpush1.bf16.msra.mxu0 0
    %1006 = vmatprep.subr.bf16.mxu0 0
    %1007 = vmatpush1.bf16.msra.mxu0 0
    %1008 = vmatprep.subr.bf16.mxu0 0
    %1009 = vmatpush1.bf16.msra.mxu0 0
    %1010 = vmatprep.subr.bf16.mxu0 0
    %1011 = vmatpush1.bf16.msra.mxu0 0
    %1012 = vmatprep.mubr.bf16.mxu0 0
    %1013 = vmatmul.mubr.bf16.gmra.mrb[0].mxu0 %v978
    %v1014 = vpop.f32.mrb[0].mxu0
    %v1015 = vadd.f32 0.0, %v1014
    %v1016 = vpop.f32.mrb[0].mxu0
    %v1017 = vadd.f32 0.0, %v1016
    %v1018 = vpop.f32.mrb[0].mxu0
    %v1019 = vpop.f32.mrb[0].mxu0
    %1020 = vdwg.mxu0
    %v1021 = vadd.f32 %v221, %v294
    %v1022 = vadd.f32 %v223, %v296
    %v1023 = vadd.f32 %v1021, %v1015
    %v1024 = vadd.f32 %v1022, %v1017
    %v1025 = vxor.u32 %v1023, 2147483648
    %v1026 = vxor.u32 %v1024, 2147483648
    %v1027 = vmul.f32 %v1025, 1.442695
    %v1028 = vpow.pop %v1027
    %v1029 = vmul.f32 %v1026, 1.442695
    %v1030 = vpow.pop %v1029
    %v1031 = vadd.f32 %v1028, 1.0
    %v1032 = vadd.f32 %v1030, 1.0
    %v1033 = vrcp.pop %v1031
    %v1034 = vmul.f32 1.0, %v1033
    %v1035 = vrcp.pop %v1032
    %v1036 = vmul.f32 1.0, %v1035
    %v1037 = vtanh.pop %v1024
    %v1038 = vmul.f32 %v1034, %v967
    %1040 = vrot.lane.b32.xlu0 %v1037, 64
    %v1041 = vpop.permute.xlu0 %1040
    %v1043 = vmul.f32 %v1034, %v1041
    %1045 = vrot.lane.b32.xlu0 %v1043, 64
    %v1046 = vpop.permute.xlu0 %1045
    %v1048 = vadd.f32 %v1038, %v1046
    %v1049 = vtanh.pop %v1048
    %1051 = vrot.lane.b32.xlu0 %v1049, 64
    %v1052 = vpop.permute.xlu0 %1051
    %v1054 = vmul.f32 %v1036, %v1052
    %s1055 = scalar_lea.vmem [#allocation2], 56
    %1056 = vst.msk [vmem:[%s1055] sm:$0xff] %vm406, %v1054
    %v1057 = vld [vmem:[#allocation2] sm:$0xff]
    %v1058 = vld [vmem:[#allocation2 + $0x8] sm:$0xff]
    %v1059 = vld [vmem:[#allocation2 + $0x10] sm:$0xff]
    %v1060 = vld [vmem:[#allocation2 + $0x18] sm:$0xff]
    %v1061 = vld [vmem:[#allocation2 + $0x20] sm:$0xff]
    %v1062 = vld [vmem:[#allocation2 + $0x28] sm:$0xff]
    %v1063 = vld [vmem:[#allocation2 + $0x30] sm:$0xff]
    %v1064 = vld [vmem:[#allocation2 + $0x38] sm:$0xff]
    %v1065 = vld [vmem:[%s6] sm:$0xff]
    %v1066 = vld [vmem:[%s6 + $0x8] sm:$0xff]
    %v1067 = vld [vmem:[%s6 + $0x10] sm:$0xff]
    %v1068 = vld [vmem:[%s6 + $0x18] sm:$0xff]
    %v1069 = vld [vmem:[%s6 + $0x20] sm:$0xff]
    %v1070 = vld [vmem:[%s6 + $0x28] sm:$0xff]
    %v1071 = vld [vmem:[%s6 + $0x30] sm:$0xff]
    %v1072 = vld [vmem:[%s6 + $0x38] sm:$0xff]
    %v1073 = vld [vmem:[%s6 + $0x40] sm:$0xff]
    %v1074 = vld [vmem:[%s6 + $0x48] sm:$0xff]
    %v1075 = vld [vmem:[%s6 + $0x50] sm:$0xff]
    %v1076 = vld [vmem:[%s6 + $0x58] sm:$0xff]
    %v1077 = vld [vmem:[%s6 + $0x60] sm:$0xff]
    %v1078 = vld [vmem:[%s6 + $0x68] sm:$0xff]
    %v1079 = vld [vmem:[%s6 + $0x70] sm:$0xff]
    %v1080 = vld [vmem:[%s6 + $0x78] sm:$0xff]
    %v1082 = vsel %vm406, %v1057, 0
    %v1085 = vsel %vm406, %v1058, 0
    %v1088 = vsel %vm406, %v1059, 0
    %v1091 = vsel %vm406, %v1060, 0
    %v1094 = vsel %vm406, %v1061, 0
    %v1097 = vsel %vm406, %v1062, 0
    %v1100 = vsel %vm406, %v1063, 0
    %v1103 = vsel %vm406, %v1064, 0
    %1105 = vmatprep.subr.mxu0 %v1066
    %1106 = vmatpush1.msra.mxu0 %v1065
    %1107 = vmatprep.subr.mxu0 %v1068
    %1108 = vmatpush1.msra.mxu0 %v1067
    %1109 = vmatprep.subr.mxu0 %v1070
    %1110 = vmatpush1.msra.mxu0 %v1069
    %1111 = vmatprep.subr.mxu0 %v1072
    %1112 = vmatpush1.msra.mxu0 %v1071
    %1113 = vmatprep.subr.mxu0 %v1074
    %1114 = vmatpush1.msra.mxu0 %v1073
    %1115 = vmatprep.subr.mxu0 %v1076
    %1116 = vmatpush1.msra.mxu0 %v1075
    %1117 = vmatprep.subr.mxu0 %v1078
    %1118 = vmatpush1.msra.mxu0 %v1077
    %1119 = vmatprep.subr.mxu0 %v1080
    %1120 = vmatpush1.msra.mxu0 %v1079
    %1121 = vmatprep.subr.mxu0 0.0
    %1122 = vmatpush1.msra.mxu0 0.0
    %1123 = vmatprep.subr.mxu0 0.0
    %1124 = vmatpush1.msra.mxu0 0.0
    %1125 = vmatprep.subr.mxu0 0.0
    %1126 = vmatpush1.msra.mxu0 0.0
    %1127 = vmatprep.subr.mxu0 0.0
    %1128 = vmatpush1.msra.mxu0 0.0
    %1129 = vmatprep.subr.mxu0 0.0
    %1130 = vmatpush1.msra.mxu0 0.0
    %1131 = vmatprep.subr.mxu0 0.0
    %1132 = vmatpush1.msra.mxu0 0.0
    %1133 = vmatprep.subr.mxu0 0.0
    %1134 = vmatpush1.msra.mxu0 0.0
    %1135 = vmatprep.subr.mxu0 0.0
    %1136 = vmatpush1.msra.mxu0 0.0
    %1137 = vmatprep.subr.mxu0 0.0
    %1138 = vmatpush1.msra.mxu0 0.0
    %1139 = vmatprep.subr.mxu0 0.0
    %1140 = vmatpush1.msra.mxu0 0.0
    %1141 = vmatprep.subr.mxu0 0.0
    %1142 = vmatpush1.msra.mxu0 0.0
    %1143 = vmatprep.subr.mxu0 0.0
    %1144 = vmatpush1.msra.mxu0 0.0
    %1145 = vmatprep.subr.mxu0 0.0
    %1146 = vmatpush1.msra.mxu0 0.0
    %1147 = vmatprep.subr.mxu0 0.0
    %1148 = vmatpush1.msra.mxu0 0.0
    %1149 = vmatprep.subr.mxu0 0.0
    %1150 = vmatpush1.msra.mxu0 0.0
    %1151 = vmatprep.subr.mxu0 0.0
    %1152 = vmatpush1.msra.mxu0 0.0
    %1153 = vmatprep.subr.mxu0 0.0
    %1154 = vmatpush1.msra.mxu0 0.0
    %1155 = vmatprep.subr.mxu0 0.0
    %1156 = vmatpush1.msra.mxu0 0.0
    %1157 = vmatprep.subr.mxu0 0.0
    %1158 = vmatpush1.msra.mxu0 0.0
    %1159 = vmatprep.subr.mxu0 0.0
    %1160 = vmatpush1.msra.mxu0 0.0
    %1161 = vmatprep.subr.mxu0 0.0
    %1162 = vmatpush1.msra.mxu0 0.0
    %1163 = vmatprep.subr.mxu0 0.0
    %1164 = vmatpush1.msra.mxu0 0.0
    %1165 = vmatprep.subr.mxu0 0.0
    %1166 = vmatpush1.msra.mxu0 0.0
    %1167 = vmatprep.subr.mxu0 0.0
    %1168 = vmatpush1.msra.mxu0 0.0
    %1169 = vmatprep.mubr.f32.mxu0 0.0
    %1170 = vmatmul.mubr.f32.gmra.mrb[0].mxu0 %v1082
    %v1171 = vpop.f32.mrb[0].mxu0
    %v1172 = vadd.f32 0.0, %v1171
    %v1173 = vpop.f32.mrb[0].mxu0
    %v1174 = vadd.f32 0.0, %v1173
    %1175 = vmatprep.mubr.f32.mxu0 0.0
    %1176 = vmatmul.mubr.f32.gmra.mrb[0].mxu0 %v1085
    %v1177 = vpop.f32.mrb[0].mxu0
    %v1178 = vadd.f32 0.0, %v1177
    %v1179 = vpop.f32.mrb[0].mxu0
    %v1180 = vadd.f32 0.0, %v1179
    %1181 = vmatprep.mubr.f32.mxu0 0.0
    %1182 = vmatmul.mubr.f32.gmra.mrb[0].mxu0 %v1088
    %v1183 = vpop.f32.mrb[0].mxu0
    %v1184 = vadd.f32 0.0, %v1183
    %v1185 = vpop.f32.mrb[0].mxu0
    %v1186 = vadd.f32 0.0, %v1185
    %1187 = vmatprep.mubr.f32.mxu0 0.0
    %1188 = vmatmul.mubr.f32.gmra.mrb[0].mxu0 %v1091
    %v1189 = vpop.f32.mrb[0].mxu0
    %v1190 = vadd.f32 0.0, %v1189
    %v1191 = vpop.f32.mrb[0].mxu0
    %v1192 = vadd.f32 0.0, %v1191
    %1193 = vmatprep.mubr.f32.mxu0 0.0
    %1194 = vmatmul.mubr.f32.gmra.mrb[0].mxu0 %v1094
    %v1195 = vpop.f32.mrb[0].mxu0
    %v1196 = vadd.f32 0.0, %v1195
    %v1197 = vpop.f32.mrb[0].mxu0
    %v1198 = vadd.f32 0.0, %v1197
    %1199 = vmatprep.mubr.f32.mxu0 0.0
    %1200 = vmatmul.mubr.f32.gmra.mrb[0].mxu0 %v1097
    %v1201 = vpop.f32.mrb[0].mxu0
    %v1202 = vadd.f32 0.0, %v1201
    %v1203 = vpop.f32.mrb[0].mxu0
    %v1204 = vadd.f32 0.0, %v1203
    %1205 = vmatprep.mubr.f32.mxu0 0.0
    %1206 = vmatmul.mubr.f32.gmra.mrb[0].mxu0 %v1100
    %v1207 = vpop.f32.mrb[0].mxu0
    %v1208 = vadd.f32 0.0, %v1207
    %v1209 = vpop.f32.mrb[0].mxu0
    %v1210 = vadd.f32 0.0, %v1209
    %1211 = vmatprep.mubr.f32.mxu0 0.0
    %1212 = vmatmul.mubr.f32.gmra.mrb[0].mxu0 %v1103
    %v1213 = vpop.f32.mrb[0].mxu0
    %v1214 = vadd.f32 0.0, %v1213
    %v1215 = vpop.f32.mrb[0].mxu0
    %v1216 = vadd.f32 0.0, %v1215
    %1217 = vdwg.mxu0
    %v1218 = vld [vmem:[%s7] sm:$0xff]
    %v1219 = vld [vmem:[%s7 + $0x8] sm:$0xff]
    %v1220 = vld [vmem:[%s7 + $0x10] sm:$0xff]
    %v1221 = vld [vmem:[%s7 + $0x18] sm:$0xff]
    %v1222 = vld [vmem:[%s7 + $0x20] sm:$0xff]
    %v1223 = vld [vmem:[%s7 + $0x28] sm:$0xff]
    %v1224 = vld [vmem:[%s7 + $0x30] sm:$0xff]
    %v1225 = vld [vmem:[%s7 + $0x38] sm:$0xff]
    %v1226 = vld [vmem:[%s7 + $0x40] sm:$0xff]
    %v1227 = vld [vmem:[%s7 + $0x48] sm:$0xff]
    %v1228 = vld [vmem:[%s7 + $0x50] sm:$0xff]
    %v1229 = vld [vmem:[%s7 + $0x58] sm:$0xff]
    %v1230 = vld [vmem:[%s7 + $0x60] sm:$0xff]
    %v1231 = vld [vmem:[%s7 + $0x68] sm:$0xff]
    %v1232 = vld [vmem:[%s7 + $0x70] sm:$0xff]
    %v1233 = vld [vmem:[%s7 + $0x78] sm:$0xff]
    %1234 = vmatprep.subr.mxu0 %v1219
    %1235 = vmatpush1.msra.mxu0 %v1218
    %1236 = vmatprep.subr.mxu0 %v1221
    %1237 = vmatpush1.msra.mxu0 %v1220
    %1238 = vmatprep.subr.mxu0 %v1223
    %1239 = vmatpush1.msra.mxu0 %v1222
    %1240 = vmatprep.subr.mxu0 %v1225
    %1241 = vmatpush1.msra.mxu0 %v1224
    %1242 = vmatprep.subr.mxu0 %v1227
    %1243 = vmatpush1.msra.mxu0 %v1226
    %1244 = vmatprep.subr.mxu0 %v1229
    %1245 = vmatpush1.msra.mxu0 %v1228
    %1246 = vmatprep.subr.mxu0 %v1231
    %1247 = vmatpush1.msra.mxu0 %v1230
    %1248 = vmatprep.subr.mxu0 %v1233
    %1249 = vmatpush1.msra.mxu0 %v1232
    %1250 = vmatprep.subr.mxu0 0.0
    %1251 = vmatpush1.msra.mxu0 0.0
    %1252 = vmatprep.subr.mxu0 0.0
    %1253 = vmatpush1.msra.mxu0 0.0
    %1254 = vmatprep.subr.mxu0 0.0
    %1255 = vmatpush1.msra.mxu0 0.0
    %1256 = vmatprep.subr.mxu0 0.0
    %1257 = vmatpush1.msra.mxu0 0.0
    %1258 = vmatprep.subr.mxu0 0.0
    %1259 = vmatpush1.msra.mxu0 0.0
    %1260 = vmatprep.subr.mxu0 0.0
    %1261 = vmatpush1.msra.mxu0 0.0
    %1262 = vmatprep.subr.mxu0 0.0
    %1263 = vmatpush1.msra.mxu0 0.0
    %1264 = vmatprep.subr.mxu0 0.0
    %1265 = vmatpush1.msra.mxu0 0.0
    %1266 = vmatprep.subr.mxu0 0.0
    %1267 = vmatpush1.msra.mxu0 0.0
    %1268 = vmatprep.subr.mxu0 0.0
    %1269 = vmatpush1.msra.mxu0 0.0
    %1270 = vmatprep.subr.mxu0 0.0
    %1271 = vmatpush1.msra.mxu0 0.0
    %1272 = vmatprep.subr.mxu0 0.0
    %1273 = vmatpush1.msra.mxu0 0.0
    %1274 = vmatprep.subr.mxu0 0.0
    %1275 = vmatpush1.msra.mxu0 0.0
    %1276 = vmatprep.subr.mxu0 0.0
    %1277 = vmatpush1.msra.mxu0 0.0
    %1278 = vmatprep.subr.mxu0 0.0
    %1279 = vmatpush1.msra.mxu0 0.0
    %1280 = vmatprep.subr.mxu0 0.0
    %1281 = vmatpush1.msra.mxu0 0.0
    %1282 = vmatprep.subr.mxu0 0.0
    %1283 = vmatpush1.msra.mxu0 0.0
    %1284 = vmatprep.subr.mxu0 0.0
    %1285 = vmatpush1.msra.mxu0 0.0
    %1286 = vmatprep.subr.mxu0 0.0
    %1287 = vmatpush1.msra.mxu0 0.0
    %1288 = vmatprep.subr.mxu0 0.0
    %1289 = vmatpush1.msra.mxu0 0.0
    %1290 = vmatprep.subr.mxu0 0.0
    %1291 = vmatpush1.msra.mxu0 0.0
    %1292 = vmatprep.subr.mxu0 0.0
    %1293 = vmatpush1.msra.mxu0 0.0
    %1294 = vmatprep.subr.mxu0 0.0
    %1295 = vmatpush1.msra.mxu0 0.0
    %1296 = vmatprep.subr.mxu0 0.0
    %1297 = vmatpush1.msra.mxu0 0.0
    %1298 = vmatprep.mubr.f32.mxu0 0.0
    %1299 = vmatmul.mubr.f32.gmra.mrb[0].mxu0 %v1082
    %v1300 = vpop.f32.mrb[0].mxu0
    %v1301 = vadd.f32 0.0, %v1300
    %v1302 = vpop.f32.mrb[0].mxu0
    %v1303 = vadd.f32 0.0, %v1302
    %1304 = vmatprep.mubr.f32.mxu0 0.0
    %1305 = vmatmul.mubr.f32.gmra.mrb[0].mxu0 %v1085
    %v1306 = vpop.f32.mrb[0].mxu0
    %v1307 = vadd.f32 0.0, %v1306
    %v1308 = vpop.f32.mrb[0].mxu0
    %v1309 = vadd.f32 0.0, %v1308
    %1310 = vmatprep.mubr.f32.mxu0 0.0
    %1311 = vmatmul.mubr.f32.gmra.mrb[0].mxu0 %v1088
    %v1312 = vpop.f32.mrb[0].mxu0
    %v1313 = vadd.f32 0.0, %v1312
    %v1314 = vpop.f32.mrb[0].mxu0
    %v1315 = vadd.f32 0.0, %v1314
    %1316 = vmatprep.mubr.f32.mxu0 0.0
    %1317 = vmatmul.mubr.f32.gmra.mrb[0].mxu0 %v1091
    %v1318 = vpop.f32.mrb[0].mxu0
    %v1319 = vadd.f32 0.0, %v1318
    %v1320 = vpop.f32.mrb[0].mxu0
    %v1321 = vadd.f32 0.0, %v1320
    %1322 = vmatprep.mubr.f32.mxu0 0.0
    %1323 = vmatmul.mubr.f32.gmra.mrb[0].mxu0 %v1094
    %v1324 = vpop.f32.mrb[0].mxu0
    %v1325 = vadd.f32 0.0, %v1324
    %v1326 = vpop.f32.mrb[0].mxu0
    %v1327 = vadd.f32 0.0, %v1326
    %1328 = vmatprep.mubr.f32.mxu0 0.0
    %1329 = vmatmul.mubr.f32.gmra.mrb[0].mxu0 %v1097
    %v1330 = vpop.f32.mrb[0].mxu0
    %v1331 = vadd.f32 0.0, %v1330
    %v1332 = vpop.f32.mrb[0].mxu0
    %v1333 = vadd.f32 0.0, %v1332
    %1334 = vmatprep.mubr.f32.mxu0 0.0
    %1335 = vmatmul.mubr.f32.gmra.mrb[0].mxu0 %v1100
    %v1336 = vpop.f32.mrb[0].mxu0
    %v1337 = vadd.f32 0.0, %v1336
    %v1338 = vpop.f32.mrb[0].mxu0
    %v1339 = vadd.f32 0.0, %v1338
    %1340 = vmatprep.mubr.f32.mxu0 0.0
    %1341 = vmatmul.mubr.f32.gmra.mrb[0].mxu0 %v1103
    %v1342 = vpop.f32.mrb[0].mxu0
    %v1343 = vadd.f32 0.0, %v1342
    %v1344 = vpop.f32.mrb[0].mxu0
    %v1345 = vadd.f32 0.0, %v1344
    %1346 = vdwg.mxu0
    %s1347 = scalar_lea.vmem %s1, 16
    %v1348 = vld [vmem:[%s1347] sm:$0xff]
    %s1349 = scalar_lea.vmem %s1, 24
    %v1350 = vld [vmem:[%s1349] sm:$0xff]
    %1352 = vrot.lane.b32.xlu0 %v1350, 32
    %v1353 = vpop.permute.xlu0 %1352
    %v1355 = vsel %vm347, %v1348, %v1353
    %s1356 = scalar_lea.vmem %s2, 16
    %v1357 = vld [vmem:[%s1356] sm:$0xff]
    %s1358 = scalar_lea.vmem %s2, 24
    %v1359 = vld [vmem:[%s1358] sm:$0xff]
    %1361 = vrot.lane.b32.xlu0 %v1359, 32
    %v1362 = vpop.permute.xlu0 %1361
    %v1364 = vsel %vm347, %v1357, %v1362
    %v1365 = vld [vmem:[#allocation7] sm:$0xff]
    %v1366 = vld [vmem:[#allocation7 + $0x8] sm:$0xff]
    %v1367 = vld [vmem:[#allocation7 + $0x10] sm:$0xff]
    %v1368 = vld [vmem:[#allocation7 + $0x18] sm:$0xff]
    %v1369 = vld [vmem:[#allocation7 + $0x20] sm:$0xff]
    %v1370 = vld [vmem:[#allocation7 + $0x28] sm:$0xff]
    %v1371 = vld [vmem:[#allocation7 + $0x30] sm:$0xff]
    %v1372 = vld [vmem:[#allocation7 + $0x38] sm:$0xff]
    %v1373 = vpack.c.bf16 %v1355, %v1355
    %v1382 = vunpack.c.l.b16 %v1365
    %v1383 = vunpack.c.h.b16 %v1365
    %v1384 = vunpack.c.l.b16 %v1366
    %v1385 = vunpack.c.h.b16 %v1366
    %v1386 = vunpack.c.l.b16 %v1367
    %v1387 = vunpack.c.h.b16 %v1367
    %v1388 = vunpack.c.l.b16 %v1368
    %v1389 = vunpack.c.h.b16 %v1368
    %v1390 = vunpack.c.l.b16 %v1369
    %v1391 = vunpack.c.h.b16 %v1369
    %v1392 = vunpack.c.l.b16 %v1370
    %v1393 = vunpack.c.h.b16 %v1370
    %v1394 = vunpack.c.l.b16 %v1371
    %v1395 = vunpack.c.h.b16 %v1371
    %v1396 = vunpack.c.l.b16 %v1372
    %v1397 = vunpack.c.h.b16 %v1372
    %v1398 = vpack.c.b16 %v1384, %v1382
    %v1399 = vpack.c.b16 %v1385, %v1383
    %v1400 = vpack.c.b16 %v1388, %v1386
    %v1401 = vpack.c.b16 %v1389, %v1387
    %v1402 = vpack.c.b16 %v1392, %v1390
    %v1403 = vpack.c.b16 %v1393, %v1391
    %v1404 = vpack.c.b16 %v1396, %v1394
    %v1405 = vpack.c.b16 %v1397, %v1395
    %v1415 = vsel %vm406, %v1373, 0
    %1417 = vmatprep.subr.bf16.mxu0 %v1399
    %1418 = vmatpush1.bf16.msra.mxu0 %v1398
    %1419 = vmatprep.subr.bf16.mxu0 %v1401
    %1420 = vmatpush1.bf16.msra.mxu0 %v1400
    %1421 = vmatprep.subr.bf16.mxu0 %v1403
    %1422 = vmatpush1.bf16.msra.mxu0 %v1402
    %1423 = vmatprep.subr.bf16.mxu0 %v1405
    %1424 = vmatpush1.bf16.msra.mxu0 %v1404
    %1425 = vmatprep.subr.bf16.mxu0 0
    %1426 = vmatpush1.bf16.msra.mxu0 0
    %1427 = vmatprep.subr.bf16.mxu0 0
    %1428 = vmatpush1.bf16.msra.mxu0 0
    %1429 = vmatprep.subr.bf16.mxu0 0
    %1430 = vmatpush1.bf16.msra.mxu0 0
    %1431 = vmatprep.subr.bf16.mxu0 0
    %1432 = vmatpush1.bf16.msra.mxu0 0
    %1433 = vmatprep.subr.bf16.mxu0 0
    %1434 = vmatpush1.bf16.msra.mxu0 0
    %1435 = vmatprep.subr.bf16.mxu0 0
    %1436 = vmatpush1.bf16.msra.mxu0 0
    %1437 = vmatprep.subr.bf16.mxu0 0
    %1438 = vmatpush1.bf16.msra.mxu0 0
    %1439 = vmatprep.subr.bf16.mxu0 0
    %1440 = vmatpush1.bf16.msra.mxu0 0
    %1441 = vmatprep.subr.bf16.mxu0 0
    %1442 = vmatpush1.bf16.msra.mxu0 0
    %1443 = vmatprep.subr.bf16.mxu0 0
    %1444 = vmatpush1.bf16.msra.mxu0 0
    %1445 = vmatprep.subr.bf16.mxu0 0
    %1446 = vmatpush1.bf16.msra.mxu0 0
    %1447 = vmatprep.subr.bf16.mxu0 0
    %1448 = vmatpush1.bf16.msra.mxu0 0
    %1449 = vmatprep.mubr.bf16.mxu0 0
    %1450 = vmatmul.mubr.bf16.gmra.mrb[0].mxu0 %v1415
    %v1451 = vpop.f32.mrb[0].mxu0
    %v1452 = vadd.f32 0.0, %v1451
    %v1453 = vpop.f32.mrb[0].mxu0
    %v1454 = vadd.f32 0.0, %v1453
    %v1455 = vpop.f32.mrb[0].mxu0
    %v1456 = vpop.f32.mrb[0].mxu0
    %1457 = vdwg.mxu0
    %v1458 = vadd.f32 %v1172, %v1343
    %v1459 = vadd.f32 %v1174, %v1345
    %v1460 = vadd.f32 %v1458, %v1452
    %v1461 = vadd.f32 %v1459, %v1454
    %v1462 = vxor.u32 %v1460, 2147483648
    %v1463 = vxor.u32 %v1461, 2147483648
    %v1464 = vmul.f32 %v1462, 1.442695
    %v1465 = vpow.pop %v1464
    %v1466 = vmul.f32 %v1463, 1.442695
    %v1467 = vpow.pop %v1466
    %v1468 = vadd.f32 %v1465, 1.0
    %v1469 = vadd.f32 %v1467, 1.0
    %v1470 = vrcp.pop %v1468
    %v1471 = vmul.f32 1.0, %v1470
    %v1472 = vrcp.pop %v1469
    %v1473 = vmul.f32 1.0, %v1472
    %v1474 = vtanh.pop %v1461
    %1476 = vrot.lane.b32.xlu0 %v1364, 64
    %v1477 = vpop.permute.xlu0 %1476
    %v1479 = vmul.f32 %v1471, %v1477
    %1481 = vrot.lane.b32.xlu0 %v1474, 64
    %v1482 = vpop.permute.xlu0 %1481
    %v1484 = vmul.f32 %v1471, %v1482
    %1486 = vrot.lane.b32.xlu0 %v1484, 64
    %v1487 = vpop.permute.xlu0 %1486
    %v1489 = vadd.f32 %v1479, %v1487
    %v1490 = vtanh.pop %v1489
    %1492 = vrot.lane.b32.xlu0 %v1490, 64
    %v1493 = vpop.permute.xlu0 %1492
    %v1495 = vmul.f32 %v1473, %v1493
    %v1496 = vpack.c.bf16 %v1495, %v1495
    %v1498 = vsel %vm406, %v1496, 0
    %1500 = vmatprep.subr.bf16.mxu0 %v1399
    %1501 = vmatpush1.bf16.msra.mxu0 %v1398
    %1502 = vmatprep.subr.bf16.mxu0 %v1401
    %1503 = vmatpush1.bf16.msra.mxu0 %v1400
    %1504 = vmatprep.subr.bf16.mxu0 %v1403
    %1505 = vmatpush1.bf16.msra.mxu0 %v1402
    %1506 = vmatprep.subr.bf16.mxu0 %v1405
    %1507 = vmatpush1.bf16.msra.mxu0 %v1404
    %1508 = vmatprep.subr.bf16.mxu0 0
    %1509 = vmatpush1.bf16.msra.mxu0 0
    %1510 = vmatprep.subr.bf16.mxu0 0
    %1511 = vmatpush1.bf16.msra.mxu0 0
    %1512 = vmatprep.subr.bf16.mxu0 0
    %1513 = vmatpush1.bf16.msra.mxu0 0
    %1514 = vmatprep.subr.bf16.mxu0 0
    %1515 = vmatpush1.bf16.msra.mxu0 0
    %1516 = vmatprep.subr.bf16.mxu0 0
    %1517 = vmatpush1.bf16.msra.mxu0 0
    %1518 = vmatprep.subr.bf16.mxu0 0
    %1519 = vmatpush1.bf16.msra.mxu0 0
    %1520 = vmatprep.subr.bf16.mxu0 0
    %1521 = vmatpush1.bf16.msra.mxu0 0
    %1522 = vmatprep.subr.bf16.mxu0 0
    %1523 = vmatpush1.bf16.msra.mxu0 0
    %1524 = vmatprep.subr.bf16.mxu0 0
    %1525 = vmatpush1.bf16.msra.mxu0 0
    %1526 = vmatprep.subr.bf16.mxu0 0
    %1527 = vmatpush1.bf16.msra.mxu0 0
    %1528 = vmatprep.subr.bf16.mxu0 0
    %1529 = vmatpush1.bf16.msra.mxu0 0
    %1530 = vmatprep.subr.bf16.mxu0 0
    %1531 = vmatpush1.bf16.msra.mxu0 0
    %1532 = vmatprep.mubr.bf16.mxu0 0
    %1533 = vmatmul.mubr.bf16.gmra.mrb[0].mxu0 %v1498
    %v1534 = vpop.f32.mrb[0].mxu0
    %v1535 = vadd.f32 0.0, %v1534
    %v1536 = vpop.f32.mrb[0].mxu0
    %v1537 = vadd.f32 0.0, %v1536
    %v1538 = vpop.f32.mrb[0].mxu0
    %v1539 = vpop.f32.mrb[0].mxu0
    %1540 = vdwg.mxu0
    %v1541 = vadd.f32 %v1178, %v1337
    %v1542 = vadd.f32 %v1180, %v1339
    %v1543 = vadd.f32 %v1541, %v1535
    %v1544 = vadd.f32 %v1542, %v1537
    %v1545 = vxor.u32 %v1543, 2147483648
    %v1546 = vxor.u32 %v1544, 2147483648
    %v1547 = vmul.f32 %v1545, 1.442695
    %v1548 = vpow.pop %v1547
    %v1549 = vmul.f32 %v1546, 1.442695
    %v1550 = vpow.pop %v1549
    %v1551 = vadd.f32 %v1548, 1.0
    %v1552 = vadd.f32 %v1550, 1.0
    %v1553 = vrcp.pop %v1551
    %v1554 = vmul.f32 1.0, %v1553
    %v1555 = vrcp.pop %v1552
    %v1556 = vmul.f32 1.0, %v1555
    %v1557 = vtanh.pop %v1544
    %v1558 = vmul.f32 %v1554, %v1489
    %1560 = vrot.lane.b32.xlu0 %v1557, 64
    %v1561 = vpop.permute.xlu0 %1560
    %v1563 = vmul.f32 %v1554, %v1561
    %1565 = vrot.lane.b32.xlu0 %v1563, 64
    %v1566 = vpop.permute.xlu0 %1565
    %v1568 = vadd.f32 %v1558, %v1566
    %v1569 = vtanh.pop %v1568
    %1571 = vrot.lane.b32.xlu0 %v1569, 64
    %v1572 = vpop.permute.xlu0 %1571
    %v1574 = vmul.f32 %v1556, %v1572
    %v1575 = vpack.c.bf16 %v1574, %v1574
    %v1577 = vsel %vm406, %v1575, 0
    %1579 = vmatprep.subr.bf16.mxu0 %v1399
    %1580 = vmatpush1.bf16.msra.mxu0 %v1398
    %1581 = vmatprep.subr.bf16.mxu0 %v1401
    %1582 = vmatpush1.bf16.msra.mxu0 %v1400
    %1583 = vmatprep.subr.bf16.mxu0 %v1403
    %1584 = vmatpush1.bf16.msra.mxu0 %v1402
    %1585 = vmatprep.subr.bf16.mxu0 %v1405
    %1586 = vmatpush1.bf16.msra.mxu0 %v1404
    %1587 = vmatprep.subr.bf16.mxu0 0
    %1588 = vmatpush1.bf16.msra.mxu0 0
    %1589 = vmatprep.subr.bf16.mxu0 0
    %1590 = vmatpush1.bf16.msra.mxu0 0
    %1591 = vmatprep.subr.bf16.mxu0 0
    %1592 = vmatpush1.bf16.msra.mxu0 0
    %1593 = vmatprep.subr.bf16.mxu0 0
    %1594 = vmatpush1.bf16.msra.mxu0 0
    %1595 = vmatprep.subr.bf16.mxu0 0
    %1596 = vmatpush1.bf16.msra.mxu0 0
    %1597 = vmatprep.subr.bf16.mxu0 0
    %1598 = vmatpush1.bf16.msra.mxu0 0
    %1599 = vmatprep.subr.bf16.mxu0 0
    %1600 = vmatpush1.bf16.msra.mxu0 0
    %1601 = vmatprep.subr.bf16.mxu0 0
    %1602 = vmatpush1.bf16.msra.mxu0 0
    %1603 = vmatprep.subr.bf16.mxu0 0
    %1604 = vmatpush1.bf16.msra.mxu0 0
    %1605 = vmatprep.subr.bf16.mxu0 0
    %1606 = vmatpush1.bf16.msra.mxu0 0
    %1607 = vmatprep.subr.bf16.mxu0 0
    %1608 = vmatpush1.bf16.msra.mxu0 0
    %1609 = vmatprep.subr.bf16.mxu0 0
    %1610 = vmatpush1.bf16.msra.mxu0 0
    %1611 = vmatprep.mubr.bf16.mxu0 0
    %1612 = vmatmul.mubr.bf16.gmra.mrb[0].mxu0 %v1577
    %v1613 = vpop.f32.mrb[0].mxu0
    %v1614 = vadd.f32 0.0, %v1613
    %v1615 = vpop.f32.mrb[0].mxu0
    %v1616 = vadd.f32 0.0, %v1615
    %v1617 = vpop.f32.mrb[0].mxu0
    %v1618 = vpop.f32.mrb[0].mxu0
    %1619 = vdwg.mxu0
    %v1620 = vadd.f32 %v1184, %v1331
    %v1621 = vadd.f32 %v1186, %v1333
    %v1622 = vadd.f32 %v1620, %v1614
    %v1623 = vadd.f32 %v1621, %v1616
    %v1624 = vxor.u32 %v1622, 2147483648
    %v1625 = vxor.u32 %v1623, 2147483648
    %v1626 = vmul.f32 %v1624, 1.442695
    %v1627 = vpow.pop %v1626
    %v1628 = vmul.f32 %v1625, 1.442695
    %v1629 = vpow.pop %v1628
    %v1630 = vadd.f32 %v1627, 1.0
    %v1631 = vadd.f32 %v1629, 1.0
    %v1632 = vrcp.pop %v1630
    %v1633 = vmul.f32 1.0, %v1632
    %v1634 = vrcp.pop %v1631
    %v1635 = vmul.f32 1.0, %v1634
    %v1636 = vtanh.pop %v1623
    %v1637 = vmul.f32 %v1633, %v1568
    %1639 = vrot.lane.b32.xlu0 %v1636, 64
    %v1640 = vpop.permute.xlu0 %1639
    %v1642 = vmul.f32 %v1633, %v1640
    %1644 = vrot.lane.b32.xlu0 %v1642, 64
    %v1645 = vpop.permute.xlu0 %1644
    %v1647 = vadd.f32 %v1637, %v1645
    %v1648 = vtanh.pop %v1647
    %1650 = vrot.lane.b32.xlu0 %v1648, 64
    %v1651 = vpop.permute.xlu0 %1650
    %v1653 = vmul.f32 %v1635, %v1651
    %v1654 = vpack.c.bf16 %v1653, %v1653
    %v1656 = vsel %vm406, %v1654, 0
    %1658 = vmatprep.subr.bf16.mxu0 %v1399
    %1659 = vmatpush1.bf16.msra.mxu0 %v1398
    %1660 = vmatprep.subr.bf16.mxu0 %v1401
    %1661 = vmatpush1.bf16.msra.mxu0 %v1400
    %1662 = vmatprep.subr.bf16.mxu0 %v1403
    %1663 = vmatpush1.bf16.msra.mxu0 %v1402
    %1664 = vmatprep.subr.bf16.mxu0 %v1405
    %1665 = vmatpush1.bf16.msra.mxu0 %v1404
    %1666 = vmatprep.subr.bf16.mxu0 0
    %1667 = vmatpush1.bf16.msra.mxu0 0
    %1668 = vmatprep.subr.bf16.mxu0 0
    %1669 = vmatpush1.bf16.msra.mxu0 0
    %1670 = vmatprep.subr.bf16.mxu0 0
    %1671 = vmatpush1.bf16.msra.mxu0 0
    %1672 = vmatprep.subr.bf16.mxu0 0
    %1673 = vmatpush1.bf16.msra.mxu0 0
    %1674 = vmatprep.subr.bf16.mxu0 0
    %1675 = vmatpush1.bf16.msra.mxu0 0
    %1676 = vmatprep.subr.bf16.mxu0 0
    %1677 = vmatpush1.bf16.msra.mxu0 0
    %1678 = vmatprep.subr.bf16.mxu0 0
    %1679 = vmatpush1.bf16.msra.mxu0 0
    %1680 = vmatprep.subr.bf16.mxu0 0
    %1681 = vmatpush1.bf16.msra.mxu0 0
    %1682 = vmatprep.subr.bf16.mxu0 0
    %1683 = vmatpush1.bf16.msra.mxu0 0
    %1684 = vmatprep.subr.bf16.mxu0 0
    %1685 = vmatpush1.bf16.msra.mxu0 0
    %1686 = vmatprep.subr.bf16.mxu0 0
    %1687 = vmatpush1.bf16.msra.mxu0 0
    %1688 = vmatprep.subr.bf16.mxu0 0
    %1689 = vmatpush1.bf16.msra.mxu0 0
    %1690 = vmatprep.mubr.bf16.mxu0 0
    %1691 = vmatmul.mubr.bf16.gmra.mrb[0].mxu0 %v1656
    %v1692 = vpop.f32.mrb[0].mxu0
    %v1693 = vadd.f32 0.0, %v1692
    %v1694 = vpop.f32.mrb[0].mxu0
    %v1695 = vadd.f32 0.0, %v1694
    %v1696 = vpop.f32.mrb[0].mxu0
    %v1697 = vpop.f32.mrb[0].mxu0
    %1698 = vdwg.mxu0
    %v1699 = vadd.f32 %v1190, %v1325
    %v1700 = vadd.f32 %v1192, %v1327
    %v1701 = vadd.f32 %v1699, %v1693
    %v1702 = vadd.f32 %v1700, %v1695
    %v1703 = vxor.u32 %v1701, 2147483648
    %v1704 = vxor.u32 %v1702, 2147483648
    %v1705 = vmul.f32 %v1703, 1.442695
    %v1706 = vpow.pop %v1705
    %v1707 = vmul.f32 %v1704, 1.442695
    %v1708 = vpow.pop %v1707
    %v1709 = vadd.f32 %v1706, 1.0
    %v1710 = vadd.f32 %v1708, 1.0
    %v1711 = vrcp.pop %v1709
    %v1712 = vmul.f32 1.0, %v1711
    %v1713 = vrcp.pop %v1710
    %v1714 = vmul.f32 1.0, %v1713
    %v1715 = vtanh.pop %v1702
    %v1716 = vmul.f32 %v1712, %v1647
    %1718 = vrot.lane.b32.xlu0 %v1715, 64
    %v1719 = vpop.permute.xlu0 %1718
    %v1721 = vmul.f32 %v1712, %v1719
    %1723 = vrot.lane.b32.xlu0 %v1721, 64
    %v1724 = vpop.permute.xlu0 %1723
    %v1726 = vadd.f32 %v1716, %v1724
    %v1727 = vtanh.pop %v1726
    %1729 = vrot.lane.b32.xlu0 %v1727, 64
    %v1730 = vpop.permute.xlu0 %1729
    %v1732 = vmul.f32 %v1714, %v1730
    %v1733 = vpack.c.bf16 %v1732, %v1732
    %v1735 = vsel %vm406, %v1733, 0
    %1737 = vmatprep.subr.bf16.mxu0 %v1399
    %1738 = vmatpush1.bf16.msra.mxu0 %v1398
    %1739 = vmatprep.subr.bf16.mxu0 %v1401
    %1740 = vmatpush1.bf16.msra.mxu0 %v1400
    %1741 = vmatprep.subr.bf16.mxu0 %v1403
    %1742 = vmatpush1.bf16.msra.mxu0 %v1402
    %1743 = vmatprep.subr.bf16.mxu0 %v1405
    %1744 = vmatpush1.bf16.msra.mxu0 %v1404
    %1745 = vmatprep.subr.bf16.mxu0 0
    %1746 = vmatpush1.bf16.msra.mxu0 0
    %1747 = vmatprep.subr.bf16.mxu0 0
    %1748 = vmatpush1.bf16.msra.mxu0 0
    %1749 = vmatprep.subr.bf16.mxu0 0
    %1750 = vmatpush1.bf16.msra.mxu0 0
    %1751 = vmatprep.subr.bf16.mxu0 0
    %1752 = vmatpush1.bf16.msra.mxu0 0
    %1753 = vmatprep.subr.bf16.mxu0 0
    %1754 = vmatpush1.bf16.msra.mxu0 0
    %1755 = vmatprep.subr.bf16.mxu0 0
    %1756 = vmatpush1.bf16.msra.mxu0 0
    %1757 = vmatprep.subr.bf16.mxu0 0
    %1758 = vmatpush1.bf16.msra.mxu0 0
    %1759 = vmatprep.subr.bf16.mxu0 0
    %1760 = vmatpush1.bf16.msra.mxu0 0
    %1761 = vmatprep.subr.bf16.mxu0 0
    %1762 = vmatpush1.bf16.msra.mxu0 0
    %1763 = vmatprep.subr.bf16.mxu0 0
    %1764 = vmatpush1.bf16.msra.mxu0 0
    %1765 = vmatprep.subr.bf16.mxu0 0
    %1766 = vmatpush1.bf16.msra.mxu0 0
    %1767 = vmatprep.subr.bf16.mxu0 0
    %1768 = vmatpush1.bf16.msra.mxu0 0
    %1769 = vmatprep.mubr.bf16.mxu0 0
    %1770 = vmatmul.mubr.bf16.gmra.mrb[0].mxu0 %v1735
    %v1771 = vpop.f32.mrb[0].mxu0
    %v1772 = vadd.f32 0.0, %v1771
    %v1773 = vpop.f32.mrb[0].mxu0
    %v1774 = vadd.f32 0.0, %v1773
    %v1775 = vpop.f32.mrb[0].mxu0
    %v1776 = vpop.f32.mrb[0].mxu0
    %1777 = vdwg.mxu0
    %v1778 = vadd.f32 %v1196, %v1319
    %v1779 = vadd.f32 %v1198, %v1321
    %v1780 = vadd.f32 %v1778, %v1772
    %v1781 = vadd.f32 %v1779, %v1774
    %v1782 = vxor.u32 %v1780, 2147483648
    %v1783 = vxor.u32 %v1781, 2147483648
    %v1784 = vmul.f32 %v1782, 1.442695
    %v1785 = vpow.pop %v1784
    %v1786 = vmul.f32 %v1783, 1.442695
    %v1787 = vpow.pop %v1786
    %v1788 = vadd.f32 %v1785, 1.0
    %v1789 = vadd.f32 %v1787, 1.0
    %v1790 = vrcp.pop %v1788
    %v1791 = vmul.f32 1.0, %v1790
    %v1792 = vrcp.pop %v1789
    %v1793 = vmul.f32 1.0, %v1792
    %v1794 = vtanh.pop %v1781
    %v1795 = vmul.f32 %v1791, %v1726
    %1797 = vrot.lane.b32.xlu0 %v1794, 64
    %v1798 = vpop.permute.xlu0 %1797
    %v1800 = vmul.f32 %v1791, %v1798
    %1802 = vrot.lane.b32.xlu0 %v1800, 64
    %v1803 = vpop.permute.xlu0 %1802
    %v1805 = vadd.f32 %v1795, %v1803
    %v1806 = vtanh.pop %v1805
    %1808 = vrot.lane.b32.xlu0 %v1806, 64
    %v1809 = vpop.permute.xlu0 %1808
    %v1811 = vmul.f32 %v1793, %v1809
    %v1812 = vpack.c.bf16 %v1811, %v1811
    %v1814 = vsel %vm406, %v1812, 0
    %1816 = vmatprep.subr.bf16.mxu0 %v1399
    %1817 = vmatpush1.bf16.msra.mxu0 %v1398
    %1818 = vmatprep.subr.bf16.mxu0 %v1401
    %1819 = vmatpush1.bf16.msra.mxu0 %v1400
    %1820 = vmatprep.subr.bf16.mxu0 %v1403
    %1821 = vmatpush1.bf16.msra.mxu0 %v1402
    %1822 = vmatprep.subr.bf16.mxu0 %v1405
    %1823 = vmatpush1.bf16.msra.mxu0 %v1404
    %1824 = vmatprep.subr.bf16.mxu0 0
    %1825 = vmatpush1.bf16.msra.mxu0 0
    %1826 = vmatprep.subr.bf16.mxu0 0
    %1827 = vmatpush1.bf16.msra.mxu0 0
    %1828 = vmatprep.subr.bf16.mxu0 0
    %1829 = vmatpush1.bf16.msra.mxu0 0
    %1830 = vmatprep.subr.bf16.mxu0 0
    %1831 = vmatpush1.bf16.msra.mxu0 0
    %1832 = vmatprep.subr.bf16.mxu0 0
    %1833 = vmatpush1.bf16.msra.mxu0 0
    %1834 = vmatprep.subr.bf16.mxu0 0
    %1835 = vmatpush1.bf16.msra.mxu0 0
    %1836 = vmatprep.subr.bf16.mxu0 0
    %1837 = vmatpush1.bf16.msra.mxu0 0
    %1838 = vmatprep.subr.bf16.mxu0 0
    %1839 = vmatpush1.bf16.msra.mxu0 0
    %1840 = vmatprep.subr.bf16.mxu0 0
    %1841 = vmatpush1.bf16.msra.mxu0 0
    %1842 = vmatprep.subr.bf16.mxu0 0
    %1843 = vmatpush1.bf16.msra.mxu0 0
    %1844 = vmatprep.subr.bf16.mxu0 0
    %1845 = vmatpush1.bf16.msra.mxu0 0
    %1846 = vmatprep.subr.bf16.mxu0 0
    %1847 = vmatpush1.bf16.msra.mxu0 0
    %1848 = vmatprep.mubr.bf16.mxu0 0
    %1849 = vmatmul.mubr.bf16.gmra.mrb[0].mxu0 %v1814
    %v1850 = vpop.f32.mrb[0].mxu0
    %v1851 = vadd.f32 0.0, %v1850
    %v1852 = vpop.f32.mrb[0].mxu0
    %v1853 = vadd.f32 0.0, %v1852
    %v1854 = vpop.f32.mrb[0].mxu0
    %v1855 = vpop.f32.mrb[0].mxu0
    %1856 = vdwg.mxu0
    %v1857 = vadd.f32 %v1202, %v1313
    %v1858 = vadd.f32 %v1204, %v1315
    %v1859 = vadd.f32 %v1857, %v1851
    %v1860 = vadd.f32 %v1858, %v1853
    %v1861 = vxor.u32 %v1859, 2147483648
    %v1862 = vxor.u32 %v1860, 2147483648
    %v1863 = vmul.f32 %v1861, 1.442695
    %v1864 = vpow.pop %v1863
    %v1865 = vmul.f32 %v1862, 1.442695
    %v1866 = vpow.pop %v1865
    %v1867 = vadd.f32 %v1864, 1.0
    %v1868 = vadd.f32 %v1866, 1.0
    %v1869 = vrcp.pop %v1867
    %v1870 = vmul.f32 1.0, %v1869
    %v1871 = vrcp.pop %v1868
    %v1872 = vmul.f32 1.0, %v1871
    %v1873 = vtanh.pop %v1860
    %v1874 = vmul.f32 %v1870, %v1805
    %1876 = vrot.lane.b32.xlu0 %v1873, 64
    %v1877 = vpop.permute.xlu0 %1876
    %v1879 = vmul.f32 %v1870, %v1877
    %1881 = vrot.lane.b32.xlu0 %v1879, 64
    %v1882 = vpop.permute.xlu0 %1881
    %v1884 = vadd.f32 %v1874, %v1882
    %v1885 = vtanh.pop %v1884
    %1887 = vrot.lane.b32.xlu0 %v1885, 64
    %v1888 = vpop.permute.xlu0 %1887
    %v1890 = vmul.f32 %v1872, %v1888
    %v1891 = vpack.c.bf16 %v1890, %v1890
    %v1893 = vsel %vm406, %v1891, 0
    %1895 = vmatprep.subr.bf16.mxu0 %v1399
    %1896 = vmatpush1.bf16.msra.mxu0 %v1398
    %1897 = vmatprep.subr.bf16.mxu0 %v1401
    %1898 = vmatpush1.bf16.msra.mxu0 %v1400
    %1899 = vmatprep.subr.bf16.mxu0 %v1403
    %1900 = vmatpush1.bf16.msra.mxu0 %v1402
    %1901 = vmatprep.subr.bf16.mxu0 %v1405
    %1902 = vmatpush1.bf16.msra.mxu0 %v1404
    %1903 = vmatprep.subr.bf16.mxu0 0
    %1904 = vmatpush1.bf16.msra.mxu0 0
    %1905 = vmatprep.subr.bf16.mxu0 0
    %1906 = vmatpush1.bf16.msra.mxu0 0
    %1907 = vmatprep.subr.bf16.mxu0 0
    %1908 = vmatpush1.bf16.msra.mxu0 0
    %1909 = vmatprep.subr.bf16.mxu0 0
    %1910 = vmatpush1.bf16.msra.mxu0 0
    %1911 = vmatprep.subr.bf16.mxu0 0
    %1912 = vmatpush1.bf16.msra.mxu0 0
    %1913 = vmatprep.subr.bf16.mxu0 0
    %1914 = vmatpush1.bf16.msra.mxu0 0
    %1915 = vmatprep.subr.bf16.mxu0 0
    %1916 = vmatpush1.bf16.msra.mxu0 0
    %1917 = vmatprep.subr.bf16.mxu0 0
    %1918 = vmatpush1.bf16.msra.mxu0 0
    %1919 = vmatprep.subr.bf16.mxu0 0
    %1920 = vmatpush1.bf16.msra.mxu0 0
    %1921 = vmatprep.subr.bf16.mxu0 0
    %1922 = vmatpush1.bf16.msra.mxu0 0
    %1923 = vmatprep.subr.bf16.mxu0 0
    %1924 = vmatpush1.bf16.msra.mxu0 0
    %1925 = vmatprep.subr.bf16.mxu0 0
    %1926 = vmatpush1.bf16.msra.mxu0 0
    %1927 = vmatprep.mubr.bf16.mxu0 0
    %1928 = vmatmul.mubr.bf16.gmra.mrb[0].mxu0 %v1893
    %v1929 = vpop.f32.mrb[0].mxu0
    %v1930 = vadd.f32 0.0, %v1929
    %v1931 = vpop.f32.mrb[0].mxu0
    %v1932 = vadd.f32 0.0, %v1931
    %v1933 = vpop.f32.mrb[0].mxu0
    %v1934 = vpop.f32.mrb[0].mxu0
    %1935 = vdwg.mxu0
    %v1936 = vadd.f32 %v1208, %v1307
    %v1937 = vadd.f32 %v1210, %v1309
    %v1938 = vadd.f32 %v1936, %v1930
    %v1939 = vadd.f32 %v1937, %v1932
    %v1940 = vxor.u32 %v1938, 2147483648
    %v1941 = vxor.u32 %v1939, 2147483648
    %v1942 = vmul.f32 %v1940, 1.442695
    %v1943 = vpow.pop %v1942
    %v1944 = vmul.f32 %v1941, 1.442695
    %v1945 = vpow.pop %v1944
    %v1946 = vadd.f32 %v1943, 1.0
    %v1947 = vadd.f32 %v1945, 1.0
    %v1948 = vrcp.pop %v1946
    %v1949 = vmul.f32 1.0, %v1948
    %v1950 = vrcp.pop %v1947
    %v1951 = vmul.f32 1.0, %v1950
    %v1952 = vtanh.pop %v1939
    %v1953 = vmul.f32 %v1949, %v1884
    %1955 = vrot.lane.b32.xlu0 %v1952, 64
    %v1956 = vpop.permute.xlu0 %1955
    %v1958 = vmul.f32 %v1949, %v1956
    %1960 = vrot.lane.b32.xlu0 %v1958, 64
    %v1961 = vpop.permute.xlu0 %1960
    %v1963 = vadd.f32 %v1953, %v1961
    %v1964 = vtanh.pop %v1963
    %1966 = vrot.lane.b32.xlu0 %v1964, 64
    %v1967 = vpop.permute.xlu0 %1966
    %v1969 = vmul.f32 %v1951, %v1967
    %v1970 = vpack.c.bf16 %v1969, %v1969
    %v1972 = vsel %vm406, %v1970, 0
    %1974 = vmatprep.subr.bf16.mxu0 %v1399
    %1975 = vmatpush1.bf16.msra.mxu0 %v1398
    %1976 = vmatprep.subr.bf16.mxu0 %v1401
    %1977 = vmatpush1.bf16.msra.mxu0 %v1400
    %1978 = vmatprep.subr.bf16.mxu0 %v1403
    %1979 = vmatpush1.bf16.msra.mxu0 %v1402
    %1980 = vmatprep.subr.bf16.mxu0 %v1405
    %1981 = vmatpush1.bf16.msra.mxu0 %v1404
    %1982 = vmatprep.subr.bf16.mxu0 0
    %1983 = vmatpush1.bf16.msra.mxu0 0
    %1984 = vmatprep.subr.bf16.mxu0 0
    %1985 = vmatpush1.bf16.msra.mxu0 0
    %1986 = vmatprep.subr.bf16.mxu0 0
    %1987 = vmatpush1.bf16.msra.mxu0 0
    %1988 = vmatprep.subr.bf16.mxu0 0
    %1989 = vmatpush1.bf16.msra.mxu0 0
    %1990 = vmatprep.subr.bf16.mxu0 0
    %1991 = vmatpush1.bf16.msra.mxu0 0
    %1992 = vmatprep.subr.bf16.mxu0 0
    %1993 = vmatpush1.bf16.msra.mxu0 0
    %1994 = vmatprep.subr.bf16.mxu0 0
    %1995 = vmatpush1.bf16.msra.mxu0 0
    %1996 = vmatprep.subr.bf16.mxu0 0
    %1997 = vmatpush1.bf16.msra.mxu0 0
    %1998 = vmatprep.subr.bf16.mxu0 0
    %1999 = vmatpush1.bf16.msra.mxu0 0
    %2000 = vmatprep.subr.bf16.mxu0 0
    %2001 = vmatpush1.bf16.msra.mxu0 0
    %2002 = vmatprep.subr.bf16.mxu0 0
    %2003 = vmatpush1.bf16.msra.mxu0 0
    %2004 = vmatprep.subr.bf16.mxu0 0
    %2005 = vmatpush1.bf16.msra.mxu0 0
    %2006 = vmatprep.mubr.bf16.mxu0 0
    %2007 = vmatmul.mubr.bf16.gmra.mrb[0].mxu0 %v1972
    %v2008 = vpop.f32.mrb[0].mxu0
    %v2009 = vadd.f32 0.0, %v2008
    %v2010 = vpop.f32.mrb[0].mxu0
    %v2011 = vadd.f32 0.0, %v2010
    %v2012 = vpop.f32.mrb[0].mxu0
    %v2013 = vpop.f32.mrb[0].mxu0
    %2014 = vdwg.mxu0
    %v2015 = vadd.f32 %v1214, %v1301
    %v2016 = vadd.f32 %v1216, %v1303
    %v2017 = vadd.f32 %v2015, %v2009
    %v2018 = vadd.f32 %v2016, %v2011
    %v2019 = vxor.u32 %v2017, 2147483648
    %v2020 = vxor.u32 %v2018, 2147483648
    %v2021 = vmul.f32 %v2019, 1.442695
    %v2022 = vpow.pop %v2021
    %v2023 = vmul.f32 %v2020, 1.442695
    %v2024 = vpow.pop %v2023
    %v2025 = vadd.f32 %v2022, 1.0
    %v2026 = vadd.f32 %v2024, 1.0
    %v2027 = vrcp.pop %v2025
    %v2028 = vmul.f32 1.0, %v2027
    %v2029 = vrcp.pop %v2026
    %v2030 = vmul.f32 1.0, %v2029
    %v2031 = vtanh.pop %v2018
    %v2032 = vmul.f32 %v2028, %v1963
    %2034 = vrot.lane.b32.xlu0 %v2031, 64
    %v2035 = vpop.permute.xlu0 %2034
    %v2037 = vmul.f32 %v2028, %v2035
    %2039 = vrot.lane.b32.xlu0 %v2037, 64
    %v2040 = vpop.permute.xlu0 %2039
    %v2042 = vadd.f32 %v2032, %v2040
    %v2043 = vtanh.pop %v2042
    %2045 = vrot.lane.b32.xlu0 %v2043, 64
    %v2046 = vpop.permute.xlu0 %2045
    %v2048 = vmul.f32 %v2030, %v2046
    %v2049 = vsel %vm347, %v2048, %v1495
    %v2050 = vld [vmem:[%s9] sm:$0xff]
    %v2051 = vld [vmem:[%s9 + $0x8] sm:$0xff]
    %v2052 = vld [vmem:[%s9 + $0x10] sm:$0xff]
    %v2053 = vld [vmem:[%s9 + $0x18] sm:$0xff]
    %v2054 = vld [vmem:[%s9 + $0x20] sm:$0xff]
    %v2055 = vld [vmem:[%s9 + $0x28] sm:$0xff]
    %v2056 = vld [vmem:[%s9 + $0x30] sm:$0xff]
    %v2057 = vld [vmem:[%s9 + $0x38] sm:$0xff]
    %v2059 = vsel %vm406, %v2049, 0
    %2061 = vmatprep.subr.mxu0 0.0
    %2062 = vmatpush1.msra.mxu0 %v2050
    %2063 = vmatprep.subr.mxu0 0.0
    %2064 = vmatpush1.msra.mxu0 %v2051
    %2065 = vmatprep.subr.mxu0 0.0
    %2066 = vmatpush1.msra.mxu0 %v2052
    %2067 = vmatprep.subr.mxu0 0.0
    %2068 = vmatpush1.msra.mxu0 %v2053
    %2069 = vmatprep.subr.mxu0 0.0
    %2070 = vmatpush1.msra.mxu0 %v2054
    %2071 = vmatprep.subr.mxu0 0.0
    %2072 = vmatpush1.msra.mxu0 %v2055
    %2073 = vmatprep.subr.mxu0 0.0
    %2074 = vmatpush1.msra.mxu0 %v2056
    %2075 = vmatprep.subr.mxu0 0.0
    %2076 = vmatpush1.msra.mxu0 %v2057
    %2077 = vmatprep.subr.mxu0 0.0
    %2078 = vmatpush1.msra.mxu0 0.0
    %2079 = vmatprep.subr.mxu0 0.0
    %2080 = vmatpush1.msra.mxu0 0.0
    %2081 = vmatprep.subr.mxu0 0.0
    %2082 = vmatpush1.msra.mxu0 0.0
    %2083 = vmatprep.subr.mxu0 0.0
    %2084 = vmatpush1.msra.mxu0 0.0
    %2085 = vmatprep.subr.mxu0 0.0
    %2086 = vmatpush1.msra.mxu0 0.0
    %2087 = vmatprep.subr.mxu0 0.0
    %2088 = vmatpush1.msra.mxu0 0.0
    %2089 = vmatprep.subr.mxu0 0.0
    %2090 = vmatpush1.msra.mxu0 0.0
    %2091 = vmatprep.subr.mxu0 0.0
    %2092 = vmatpush1.msra.mxu0 0.0
    %2093 = vmatprep.subr.mxu0 0.0
    %2094 = vmatpush1.msra.mxu0 0.0
    %2095 = vmatprep.subr.mxu0 0.0
    %2096 = vmatpush1.msra.mxu0 0.0
    %2097 = vmatprep.subr.mxu0 0.0
    %2098 = vmatpush1.msra.mxu0 0.0
    %2099 = vmatprep.subr.mxu0 0.0
    %2100 = vmatpush1.msra.mxu0 0.0
    %2101 = vmatprep.subr.mxu0 0.0
    %2102 = vmatpush1.msra.mxu0 0.0
    %2103 = vmatprep.subr.mxu0 0.0
    %2104 = vmatpush1.msra.mxu0 0.0
    %2105 = vmatprep.subr.mxu0 0.0
    %2106 = vmatpush1.msra.mxu0 0.0
    %2107 = vmatprep.subr.mxu0 0.0
    %2108 = vmatpush1.msra.mxu0 0.0
    %2109 = vmatprep.subr.mxu0 0.0
    %2110 = vmatpush1.msra.mxu0 0.0
    %2111 = vmatprep.subr.mxu0 0.0
    %2112 = vmatpush1.msra.mxu0 0.0
    %2113 = vmatprep.subr.mxu0 0.0
    %2114 = vmatpush1.msra.mxu0 0.0
    %2115 = vmatprep.subr.mxu0 0.0
    %2116 = vmatpush1.msra.mxu0 0.0
    %2117 = vmatprep.subr.mxu0 0.0
    %2118 = vmatpush1.msra.mxu0 0.0
    %2119 = vmatprep.subr.mxu0 0.0
    %2120 = vmatpush1.msra.mxu0 0.0
    %2121 = vmatprep.subr.mxu0 0.0
    %2122 = vmatpush1.msra.mxu0 0.0
    %2123 = vmatprep.subr.mxu0 0.0
    %2124 = vmatpush1.msra.mxu0 0.0
    %2125 = vmatprep.mubr.f32.mxu0 0.0
    %2126 = vmatmul.mubr.f32.gmra.mrb[0].mxu0 %v2059
    %v2127 = vpop.f32.mrb[0].mxu0
    %v2128 = vadd.f32 0.0, %v2127
    %v2129 = vpop.f32.mrb[0].mxu0
    %2130 = vdwg.mxu0
    %2131 = vst.msk [vmem:[%s10] sm:$0xff] %vm347, %v2128
    %2133 = vrot.lane.b32.xlu0 %v2048, 64
    %v2134 = vpop.permute.xlu0 %2133
    %2137 = vrot.lane.b32.xlu0 %v1048, 64
    %v2138 = vpop.permute.xlu0 %2137
    %v2140 = vsel %vm406, %v1054, %v2134
    %v2141 = vsel %vm406, %v2138, %v2042
    %2142 = vst [vmem:[%s11] sm:$0xff] %v2140
    %2143 = vst [vmem:[%s11 + $0x8] sm:$0xff] %v2141
    // Predicated region
    $region54: #{lstm_model_forward_pallas.1} parent=1 // pred_check
      _
    $region55: #{lstm_model_forward_pallas.1} parent=1 // pred_check_branch
      %2145 = sbr.rel (0) target = $region57
    $region56: #{lstm_model_forward_pallas.1} parent=1 // pred_region
      _
    $region57: #{lstm_model_forward_pallas.1} parent=1 // pred_fallthru
      _
    // Predicated region
    $region58: #{lstm_model_forward_pallas.1} parent=1 // pred_check
      _
    $region59: #{lstm_model_forward_pallas.1} parent=1 // pred_check_branch
      %2147 = sbr.rel (0) target = $region61
    $region60: #{lstm_model_forward_pallas.1} parent=1 // pred_region
      _
    $region61: #{lstm_model_forward_pallas.1} parent=1 // pred_fallthru
      _
    // Predicated region
    $region62: #{lstm_model_forward_pallas.1} parent=1 // pred_check
      _
    $region63: #{lstm_model_forward_pallas.1} parent=1 // pred_check_branch
      %2149 = sbr.rel (0) target = $region65
    $region64: #{lstm_model_forward_pallas.1} parent=1 // pred_region
      _
    $region65: #{lstm_model_forward_pallas.1} parent=1 // pred_fallthru
      _
    // Predicated region
    $region66: #{lstm_model_forward_pallas.1} parent=1 // pred_check
      _
    $region67: #{lstm_model_forward_pallas.1} parent=1 // pred_check_branch
      %2151 = sbr.rel (0) target = $region69
    $region68: #{lstm_model_forward_pallas.1} parent=1 // pred_region
      _
    $region69: #{lstm_model_forward_pallas.1} parent=1 // pred_fallthru
      _
    %2152 = vsyncpa [#allocation4], 1
    %2153 = vsyncpa [#allocation6], 1

</llo_original>
